<compile_context>
chip_gen: v6e
topology: v6e:2x2x1
jax: 0.10.0
libtpu: 0.0.40
codegen_flags: <defaults>
</compile_context>

<pallas_src>
import jax
import jax.numpy as jnp
from jax.experimental import pallas as pl
from jax.experimental.pallas import tpu as pltpu


def sentiment_lstm_kernel(x_ref,            # (t_chunk, B, D)   bf16
                          w_ih0_ref,        # (D, 4H)           bf16
                          w_hh0_ref,        # (H, 4H)           bf16
                          b0_ref,           # (1, 4H)           f32 (b_ih+b_hh, reordered)
                          w1_ref,           # (2H, 4H)          bf16 ([W_ih1^T; W_hh1^T])
                          b1_ref,           # (1, 4H)           f32
                          fc1_w_ref,        # (H, 32)           bf16
                          fc1_b_ref,        # (1, 32)           f32
                          fc2_w_ref,        # (32, 1)           bf16
                          fc2_b_ref,        # (1, 1)            f32
                          out_ref,          # (B, 1)            f32
                          h0_ref, c0_ref, h1_ref, c1_ref):  # VMEM scratch (B, H) f32
    t_chunk, B, D = x_ref.shape
    H = w_hh0_ref.shape[0]

    @pl.when(pl.program_id(0) == 0)
    def _init():
        h0_ref[...] = jnp.zeros_like(h0_ref)
        c0_ref[...] = jnp.zeros_like(c0_ref)
        h1_ref[...] = jnp.zeros_like(h1_ref)
        c1_ref[...] = jnp.zeros_like(c1_ref)

    # Hoisted layer-0 input projection for the whole chunk: one (t_chunk*B, D) x (D, 4H)
    # MXU call instead of t_chunk tiny ones on the sequential critical path.
    x2d = x_ref[...].reshape(t_chunk * B, D)
    xw0 = (jnp.dot(x2d, w_ih0_ref[...], preferred_element_type=jnp.float32)
           + b0_ref[...]).reshape(t_chunk, B, 4 * H)

    w_hh0 = w_hh0_ref[...]
    w1 = w1_ref[...]
    # Hoisted bias broadcast (JAX does not CSE broadcast_in_dim inside loops).
    b1 = jnp.broadcast_to(b1_ref[...], (B, 4 * H))

    def gates_to_hc(gates, c):
        # gate order after wrapper reordering: [i, f, o, g]
        s = jax.nn.sigmoid(gates[:, :3 * H])     # one EUP launch for i,f,o
        g = jnp.tanh(gates[:, 3 * H:])           # one EUP launch for g
        i = s[:, :H]
        f = s[:, H:2 * H]
        o = s[:, 2 * H:3 * H]
        c_new = f * c + i * g
        h_new = o * jnp.tanh(c_new)
        return h_new, c_new

    h0 = h0_ref[...]
    c0 = c0_ref[...]
    h1 = h1_ref[...]
    c1 = c1_ref[...]

    # Fully-unrolled time loop (static trip count -> straight-line code, static
    # slices into xw0, and cross-step ILP for the LLO scheduler).
    for t in range(t_chunk):
        # layer 0: only the recurrent matmul remains in the loop
        g0 = xw0[t] + jnp.dot(h0.astype(w_hh0.dtype), w_hh0,
                              preferred_element_type=jnp.float32)
        h0, c0 = gates_to_hc(g0, c0)
        # layer 1: fused input+recurrent matmul, concat fills one 128-lane vreg
        hh = jnp.concatenate([h0, h1], axis=-1).astype(w1.dtype)   # (B, 2H)
        g1 = jnp.dot(hh, w1, preferred_element_type=jnp.float32) + b1
        h1, c1 = gates_to_hc(g1, c1)

    h0_ref[...] = h0
    c0_ref[...] = c0
    h1_ref[...] = h1
    c1_ref[...] = c1

    @pl.when(pl.program_id(0) == pl.num_programs(0) - 1)
    def _finalize():
        # FC head: Linear(H,32) -> ReLU -> Dropout(identity, eval) -> Linear(32,1) -> Sigmoid
        z = (jnp.dot(h1.astype(fc1_w_ref.dtype), fc1_w_ref[...],
                     preferred_element_type=jnp.float32) + fc1_b_ref[...])
        z = jnp.maximum(z, 0.0)
        y = (jnp.dot(z.astype(fc2_w_ref.dtype), fc2_w_ref[...],
                     preferred_element_type=jnp.float32) + fc2_b_ref[...])
        out_ref[...] = jax.nn.sigmoid(y)


def init_params(key, input_size, hidden_size=64):
    """Parameters in the original PyTorch layout (gate order [i,f,g,o])."""
    H = hidden_size
    ks = jax.random.split(key, 10)
    u = lambda k, shape, s: jax.random.uniform(k, shape, jnp.float32, -s, s)
    s_lstm = 1.0 / jnp.sqrt(H)
    return {
        "w_ih0": u(ks[0], (4 * H, input_size), s_lstm),
        "w_hh0": u(ks[1], (4 * H, H), s_lstm),
        "b0":    u(ks[2], (1, 4 * H), s_lstm),            # b_ih0 + b_hh0 pre-summed
        "w_ih1": u(ks[3], (4 * H, H), s_lstm),
        "w_hh1": u(ks[4], (4 * H, H), s_lstm),
        "b1":    u(ks[5], (1, 4 * H), s_lstm),
        "fc1_w": u(ks[6], (32, H), 1.0 / jnp.sqrt(H)),
        "fc1_b": u(ks[7], (1, 32), 1.0 / jnp.sqrt(H)),
        "fc2_w": u(ks[8], (1, 32), 1.0 / jnp.sqrt(32.0)),
        "fc2_b": u(ks[9], (1, 1), 1.0 / jnp.sqrt(32.0)),
    }


def _prep_params(params, compute_dtype=jnp.bfloat16):
    """Wrapper-side weight plumbing: reorder gates [i,f,g,o]->[i,f,o,g],
    pre-transpose to (K, N), stack layer-1 weights, cast matmul operands to bf16."""
    H = params["w_hh0"].shape[1]
    perm = jnp.concatenate([jnp.arange(0, 2 * H),        # i, f
                            jnp.arange(3 * H, 4 * H),    # o
                            jnp.arange(2 * H, 3 * H)])   # g

    ro_rows = lambda w: w[perm]          # (4H, K) rows grouped per gate
    ro_cols = lambda b: b[:, perm]       # (1, 4H)

    w_ih0 = ro_rows(params["w_ih0"]).T.astype(compute_dtype)          # (D, 4H)
    w_hh0 = ro_rows(params["w_hh0"]).T.astype(compute_dtype)          # (H, 4H)
    b0 = ro_cols(params["b0"]).astype(jnp.float32)                    # (1, 4H)
    w1 = jnp.concatenate([ro_rows(params["w_ih1"]).T,
                          ro_rows(params["w_hh1"]).T],
                         axis=0).astype(compute_dtype)                # (2H, 4H)
    b1 = ro_cols(params["b1"]).astype(jnp.float32)                    # (1, 4H)
    fc1_w = params["fc1_w"].T.astype(compute_dtype)                   # (H, 32)
    fc1_b = params["fc1_b"].astype(jnp.float32)                       # (1, 32)
    fc2_w = params["fc2_w"].T.astype(compute_dtype)                   # (32, 1)
    fc2_b = params["fc2_b"].astype(jnp.float32)                       # (1, 1)
    return (w_ih0, w_hh0, b0, w1, b1, fc1_w, fc1_b, fc2_w, fc2_b)


def sentiment_lstm_forward(x, params, *, t_chunk=None,
                           compute_dtype=jnp.bfloat16):
    """x: (B, T, D) batch_first, like the PyTorch module. Returns (B, 1) in [0, 1]."""
    B, T, D = x.shape
    H = params["w_hh0"].shape[1]

    # Pad batch to a full sublane group so vregs / MXU rows are not mostly idle.
    B_pad = max(8, ((B + 7) // 8) * 8)

    if t_chunk is None:
        t_chunk = T
    assert T % t_chunk == 0, "t_chunk must divide T"
    n_chunks = T // t_chunk

    x_tm = jnp.transpose(x, (1, 0, 2)).astype(compute_dtype)   # (T, B, D) time-major
    if B_pad != B:
        x_tm = jnp.pad(x_tm, ((0, 0), (0, B_pad - B), (0, 0)))

    w_args = _prep_params(params, compute_dtype)

    def const_spec(a):
        nd = a.ndim
        return pl.BlockSpec(a.shape, lambda t, _nd=nd: (0,) * _nd)

    # TODO(synk): for large B on v7x, add a leading "parallel" grid axis over
    # batch chunks (per-chunk h/c scratch) to use both TensorCores.
    out = pl.pallas_call(
        sentiment_lstm_kernel,
        out_shape=jax.ShapeDtypeStruct((B_pad, 1), jnp.float32),
        grid=(n_chunks,),
        in_specs=[pl.BlockSpec((t_chunk, B_pad, D), lambda t: (t, 0, 0))]
                 + [const_spec(a) for a in w_args],
        out_specs=pl.BlockSpec((B_pad, 1), lambda t: (0, 0)),
        scratch_shapes=[pltpu.VMEM((B_pad, H), jnp.float32)] * 4,
        compiler_params=pltpu.CompilerParams(
            dimension_semantics=("arbitrary",)),   # sequential recurrence over T
    )(x_tm, *w_args)

    return out[:B]


def _reference_forward(x, params):
    """Pure-JAX f32 reference matching the PyTorch module (eval mode)."""
    B, T, D = x.shape
    H = params["w_hh0"].shape[1]

    def cell(x_t, h, c, w_ih, w_hh, b):
        gates = x_t @ w_ih.T + h @ w_hh.T + b
        i = jax.nn.sigmoid(gates[:, 0 * H:1 * H])
        f = jax.nn.sigmoid(gates[:, 1 * H:2 * H])
        g = jnp.tanh(gates[:, 2 * H:3 * H])
        o = jax.nn.sigmoid(gates[:, 3 * H:4 * H])
        c = f * c + i * g
        return o * jnp.tanh(c), c

    h0 = c0 = h1 = c1 = jnp.zeros((B, H), jnp.float32)
    for t in range(T):
        h0, c0 = cell(x[:, t, :], h0, c0, params["w_ih0"], params["w_hh0"], params["b0"])
        h1, c1 = cell(h0, h1, c1, params["w_ih1"], params["w_hh1"], params["b1"])
    z = jnp.maximum(h1 @ params["fc1_w"].T + params["fc1_b"], 0.0)
    return jax.nn.sigmoid(z @ params["fc2_w"].T + params["fc2_b"])


if __name__ == "__main__":
    B, T, D, H = 2, 8, 16, 64
    key = jax.random.PRNGKey(0)
    k_x, k_p = jax.random.split(key)
    x = jax.random.normal(k_x, (B, T, D), jnp.float32)
    params = init_params(k_p, input_size=D, hidden_size=H)

    # t_chunk=4 -> grid=(2,): exercises T-chunk streaming with VMEM-carried state.
    out = sentiment_lstm_forward(x, params, t_chunk=4)
    out = jax.block_until_ready(out)

    ref = _reference_forward(x, params)
    assert out.shape == (B, 1)
    assert jnp.all(jnp.isfinite(out))
    assert jnp.allclose(out, ref, atol=2e-2, rtol=2e-2)
    print("KERNEL_OK")
</pallas_src>

<mosaic_0001>
module attributes {stable_mosaic.version = 11 : i64} {
  func.func @sentiment_lstm_kernel(%arg0: i32, %arg1: memref<4x8x16xbf16, #tpu.memory_space<vmem>>, %arg2: memref<16x256xbf16, #tpu.memory_space<vmem>>, %arg3: memref<64x256xbf16, #tpu.memory_space<vmem>>, %arg4: memref<1x256xf32, #tpu.memory_space<vmem>>, %arg5: memref<128x256xbf16, #tpu.memory_space<vmem>>, %arg6: memref<1x256xf32, #tpu.memory_space<vmem>>, %arg7: memref<64x32xbf16, #tpu.memory_space<vmem>>, %arg8: memref<1x32xf32, #tpu.memory_space<vmem>>, %arg9: memref<32x1xbf16, #tpu.memory_space<vmem>>, %arg10: memref<1x1xf32, #tpu.memory_space<vmem>>, %arg11: memref<8x1xf32, #tpu.memory_space<vmem>>, %arg12: memref<8x64xf32, #tpu.memory_space<vmem>>, %arg13: memref<8x64xf32, #tpu.memory_space<vmem>>, %arg14: memref<8x64xf32, #tpu.memory_space<vmem>>, %arg15: memref<8x64xf32, #tpu.memory_space<vmem>>) attributes {dimension_semantics = [#tpu.dimension_semantics<arbitrary>], iteration_bounds = array<i64: 2>, scalar_prefetch = 0 : i64, scratch_operands = 4 : i64, tpu.core_type = #tpu.core_type<tc>, window_params = [{transform_indices = @transform_0, window_bounds = array<i64: 4, 8, 16>}, {pipeline_mode = #tpu.pipeline_mode<synchronous>, transform_indices = @transform_1, window_bounds = array<i64: 16, 256>}, {pipeline_mode = #tpu.pipeline_mode<synchronous>, transform_indices = @transform_2, window_bounds = array<i64: 64, 256>}, {pipeline_mode = #tpu.pipeline_mode<synchronous>, transform_indices = @transform_3, window_bounds = array<i64: 1, 256>}, {pipeline_mode = #tpu.pipeline_mode<synchronous>, transform_indices = @transform_4, window_bounds = array<i64: 128, 256>}, {pipeline_mode = #tpu.pipeline_mode<synchronous>, transform_indices = @transform_5, window_bounds = array<i64: 1, 256>}, {pipeline_mode = #tpu.pipeline_mode<synchronous>, transform_indices = @transform_6, window_bounds = array<i64: 64, 32>}, {pipeline_mode = #tpu.pipeline_mode<synchronous>, transform_indices = @transform_7, window_bounds = array<i64: 1, 32>}, {pipeline_mode = #tpu.pipeline_mode<synchronous>, transform_indices = @transform_8, window_bounds = array<i64: 32, 1>}, {pipeline_mode = #tpu.pipeline_mode<synchronous>, transform_indices = @transform_9, window_bounds = array<i64: 1, 1>}, {pipeline_mode = #tpu.pipeline_mode<synchronous>, transform_indices = @transform_10, window_bounds = array<i64: 8, 1>}]} {
    %c0_i32 = arith.constant 0 : i32
    %0 = arith.cmpi eq, %arg0, %c0_i32 : i32
    %1 = arith.extui %0 : i1 to i32
    %c0_i32_0 = arith.constant 0 : i32
    %2 = arith.cmpi ne, %1, %c0_i32_0 : i32
    scf.if %2 {
      %cst_46 = arith.constant 0.000000e+00 : f32
      %191 = vector.broadcast %cst_46 : f32 to vector<8x64xf32>
      %c0_47 = arith.constant 0 : index
      %c0_48 = arith.constant 0 : index
      %192 = vector.load %arg12[%c0_47, %c0_48] : memref<8x64xf32, #tpu.memory_space<vmem>>, vector<8x64xf32>
      tpu.vector_store %arg12[%c0_47, %c0_48], %191 {strides = array<i32>} : memref<8x64xf32, #tpu.memory_space<vmem>>, vector<8x64xf32>,
      %cst_49 = arith.constant 0.000000e+00 : f32
      %193 = vector.broadcast %cst_49 : f32 to vector<8x64xf32>
      %c0_50 = arith.constant 0 : index
      %c0_51 = arith.constant 0 : index
      %194 = vector.load %arg13[%c0_50, %c0_51] : memref<8x64xf32, #tpu.memory_space<vmem>>, vector<8x64xf32>
      tpu.vector_store %arg13[%c0_50, %c0_51], %193 {strides = array<i32>} : memref<8x64xf32, #tpu.memory_space<vmem>>, vector<8x64xf32>,
      %cst_52 = arith.constant 0.000000e+00 : f32
      %195 = vector.broadcast %cst_52 : f32 to vector<8x64xf32>
      %c0_53 = arith.constant 0 : index
      %c0_54 = arith.constant 0 : index
      %196 = vector.load %arg14[%c0_53, %c0_54] : memref<8x64xf32, #tpu.memory_space<vmem>>, vector<8x64xf32>
      tpu.vector_store %arg14[%c0_53, %c0_54], %195 {strides = array<i32>} : memref<8x64xf32, #tpu.memory_space<vmem>>, vector<8x64xf32>,
      %cst_55 = arith.constant 0.000000e+00 : f32
      %197 = vector.broadcast %cst_55 : f32 to vector<8x64xf32>
      %c0_56 = arith.constant 0 : index
      %c0_57 = arith.constant 0 : index
      %198 = vector.load %arg15[%c0_56, %c0_57] : memref<8x64xf32, #tpu.memory_space<vmem>>, vector<8x64xf32>
      tpu.vector_store %arg15[%c0_56, %c0_57], %197 {strides = array<i32>} : memref<8x64xf32, #tpu.memory_space<vmem>>, vector<8x64xf32>,
    } else {
    }
    %c0 = arith.constant 0 : index
    %c0_1 = arith.constant 0 : index
    %c0_2 = arith.constant 0 : index
    %3 = vector.load %arg1[%c0, %c0_1, %c0_2] : memref<4x8x16xbf16, #tpu.memory_space<vmem>>, vector<4x8x16xbf16>
    %4 = vector.shape_cast %3 : vector<4x8x16xbf16> to vector<32x16xbf16>
    %c0_3 = arith.constant 0 : index
    %c0_4 = arith.constant 0 : index
    %5 = vector.load %arg2[%c0_3, %c0_4] : memref<16x256xbf16, #tpu.memory_space<vmem>>, vector<16x256xbf16>
    %cst = arith.constant dense<0.000000e+00> : vector<32x256xf32>
    %6 = tpu.matmul %4, %5, %cst {dimension_numbers = #tpu.dot_dimension_numbers<[1], [0], [0], [1], [0, 0, 1, 1], [], []>} : vector<32x16xbf16>, vector<16x256xbf16>, vector<32x256xf32> -> vector<32x256xf32>
    %c0_5 = arith.constant 0 : index
    %c0_6 = arith.constant 0 : index
    %7 = vector.load %arg4[%c0_5, %c0_6] : memref<1x256xf32, #tpu.memory_space<vmem>>, vector<1x256xf32>
    %8 = vector.broadcast %7 : vector<1x256xf32> to vector<32x256xf32>
    %9 = arith.addf %6, %8 : vector<32x256xf32>
    %10 = vector.shape_cast %9 : vector<32x256xf32> to vector<4x8x256xf32>
    %c0_7 = arith.constant 0 : index
    %c0_8 = arith.constant 0 : index
    %11 = vector.load %arg3[%c0_7, %c0_8] : memref<64x256xbf16, #tpu.memory_space<vmem>>, vector<64x256xbf16>
    %c0_9 = arith.constant 0 : index
    %c0_10 = arith.constant 0 : index
    %12 = vector.load %arg5[%c0_9, %c0_10] : memref<128x256xbf16, #tpu.memory_space<vmem>>, vector<128x256xbf16>
    %c0_11 = arith.constant 0 : index
    %c0_12 = arith.constant 0 : index
    %13 = vector.load %arg6[%c0_11, %c0_12] : memref<1x256xf32, #tpu.memory_space<vmem>>, vector<1x256xf32>
    %14 = vector.shape_cast %13 : vector<1x256xf32> to vector<1x256xf32>
    %15 = vector.broadcast %14 : vector<1x256xf32> to vector<8x256xf32>
    %c0_13 = arith.constant 0 : index
    %c0_14 = arith.constant 0 : index
    %16 = vector.load %arg12[%c0_13, %c0_14] : memref<8x64xf32, #tpu.memory_space<vmem>>, vector<8x64xf32>
    %c0_15 = arith.constant 0 : index
    %c0_16 = arith.constant 0 : index
    %17 = vector.load %arg13[%c0_15, %c0_16] : memref<8x64xf32, #tpu.memory_space<vmem>>, vector<8x64xf32>
    %c0_17 = arith.constant 0 : index
    %c0_18 = arith.constant 0 : index
    %18 = vector.load %arg14[%c0_17, %c0_18] : memref<8x64xf32, #tpu.memory_space<vmem>>, vector<8x64xf32>
    %c0_19 = arith.constant 0 : index
    %c0_20 = arith.constant 0 : index
    %19 = vector.load %arg15[%c0_19, %c0_20] : memref<8x64xf32, #tpu.memory_space<vmem>>, vector<8x64xf32>
    %20 = vector.extract_strided_slice %10 {offsets = [0, 0, 0], sizes = [1, 8, 256], strides = [1, 1, 1]} : vector<4x8x256xf32> to vector<1x8x256xf32>
    %21 = vector.shape_cast %20 : vector<1x8x256xf32> to vector<8x256xf32>
    %22 = arith.truncf %16 : vector<8x64xf32> to vector<8x64xbf16>
    %cst_21 = arith.constant dense<0.000000e+00> : vector<8x256xf32>
    %23 = tpu.matmul %22, %11, %cst_21 {dimension_numbers = #tpu.dot_dimension_numbers<[1], [0], [0], [1], [0, 0, 1, 1], [], []>} : vector<8x64xbf16>, vector<64x256xbf16>, vector<8x256xf32> -> vector<8x256xf32>
    %24 = arith.addf %21, %23 : vector<8x256xf32>
    %25 = vector.extract_strided_slice %24 {offsets = [0, 0], sizes = [8, 192], strides = [1, 1]} : vector<8x256xf32> to vector<8x192xf32>
    %26 = arith.negf %25 : vector<8x192xf32>
    %27 = math.exp %26 : vector<8x192xf32>
    %cst_22 = arith.constant 1.000000e+00 : f32
    %28 = vector.broadcast %cst_22 : f32 to vector<8x192xf32>
    %29 = arith.addf %28, %27 : vector<8x192xf32>
    %30 = arith.divf %28, %29 : vector<8x192xf32>
    %31 = vector.extract_strided_slice %24 {offsets = [0, 192], sizes = [8, 64], strides = [1, 1]} : vector<8x256xf32> to vector<8x64xf32>
    %32 = math.tanh %31 : vector<8x64xf32>
    %33 = vector.extract_strided_slice %30 {offsets = [0, 0], sizes = [8, 64], strides = [1, 1]} : vector<8x192xf32> to vector<8x64xf32>
    %34 = vector.extract_strided_slice %30 {offsets = [0, 64], sizes = [8, 64], strides = [1, 1]} : vector<8x192xf32> to vector<8x64xf32>
    %35 = vector.extract_strided_slice %30 {offsets = [0, 128], sizes = [8, 64], strides = [1, 1]} : vector<8x192xf32> to vector<8x64xf32>
    %36 = arith.mulf %34, %17 : vector<8x64xf32>
    %37 = arith.mulf %33, %32 : vector<8x64xf32>
    %38 = arith.addf %36, %37 : vector<8x64xf32>
    %39 = math.tanh %38 : vector<8x64xf32>
    %40 = arith.mulf %35, %39 : vector<8x64xf32>
    %41 = tpu.concatenate %40, %18 in 1 : vector<8x64xf32>, vector<8x64xf32> -> vector<8x128xf32>
    %42 = arith.truncf %41 : vector<8x128xf32> to vector<8x128xbf16>
    %cst_23 = arith.constant dense<0.000000e+00> : vector<8x256xf32>
    %43 = tpu.matmul %42, %12, %cst_23 {dimension_numbers = #tpu.dot_dimension_numbers<[1], [0], [0], [1], [0, 0, 1, 1], [], []>} : vector<8x128xbf16>, vector<128x256xbf16>, vector<8x256xf32> -> vector<8x256xf32>
    %44 = arith.addf %43, %15 : vector<8x256xf32>
    %45 = vector.extract_strided_slice %44 {offsets = [0, 0], sizes = [8, 192], strides = [1, 1]} : vector<8x256xf32> to vector<8x192xf32>
    %46 = arith.negf %45 : vector<8x192xf32>
    %47 = math.exp %46 : vector<8x192xf32>
    %cst_24 = arith.constant 1.000000e+00 : f32
    %48 = vector.broadcast %cst_24 : f32 to vector<8x192xf32>
    %49 = arith.addf %48, %47 : vector<8x192xf32>
    %50 = arith.divf %48, %49 : vector<8x192xf32>
    %51 = vector.extract_strided_slice %44 {offsets = [0, 192], sizes = [8, 64], strides = [1, 1]} : vector<8x256xf32> to vector<8x64xf32>
    %52 = math.tanh %51 : vector<8x64xf32>
    %53 = vector.extract_strided_slice %50 {offsets = [0, 0], sizes = [8, 64], strides = [1, 1]} : vector<8x192xf32> to vector<8x64xf32>
    %54 = vector.extract_strided_slice %50 {offsets = [0, 64], sizes = [8, 64], strides = [1, 1]} : vector<8x192xf32> to vector<8x64xf32>
    %55 = vector.extract_strided_slice %50 {offsets = [0, 128], sizes = [8, 64], strides = [1, 1]} : vector<8x192xf32> to vector<8x64xf32>
    %56 = arith.mulf %54, %19 : vector<8x64xf32>
    %57 = arith.mulf %53, %52 : vector<8x64xf32>
    %58 = arith.addf %56, %57 : vector<8x64xf32>
    %59 = math.tanh %58 : vector<8x64xf32>
    %60 = arith.mulf %55, %59 : vector<8x64xf32>
    %61 = vector.extract_strided_slice %10 {offsets = [1, 0, 0], sizes = [1, 8, 256], strides = [1, 1, 1]} : vector<4x8x256xf32> to vector<1x8x256xf32>
    %62 = vector.shape_cast %61 : vector<1x8x256xf32> to vector<8x256xf32>
    %63 = arith.truncf %40 : vector<8x64xf32> to vector<8x64xbf16>
    %cst_25 = arith.constant dense<0.000000e+00> : vector<8x256xf32>
    %64 = tpu.matmul %63, %11, %cst_25 {dimension_numbers = #tpu.dot_dimension_numbers<[1], [0], [0], [1], [0, 0, 1, 1], [], []>} : vector<8x64xbf16>, vector<64x256xbf16>, vector<8x256xf32> -> vector<8x256xf32>
    %65 = arith.addf %62, %64 : vector<8x256xf32>
    %66 = vector.extract_strided_slice %65 {offsets = [0, 0], sizes = [8, 192], strides = [1, 1]} : vector<8x256xf32> to vector<8x192xf32>
    %67 = arith.negf %66 : vector<8x192xf32>
    %68 = math.exp %67 : vector<8x192xf32>
    %cst_26 = arith.constant 1.000000e+00 : f32
    %69 = vector.broadcast %cst_26 : f32 to vector<8x192xf32>
    %70 = arith.addf %69, %68 : vector<8x192xf32>
    %71 = arith.divf %69, %70 : vector<8x192xf32>
    %72 = vector.extract_strided_slice %65 {offsets = [0, 192], sizes = [8, 64], strides = [1, 1]} : vector<8x256xf32> to vector<8x64xf32>
    %73 = math.tanh %72 : vector<8x64xf32>
    %74 = vector.extract_strided_slice %71 {offsets = [0, 0], sizes = [8, 64], strides = [1, 1]} : vector<8x192xf32> to vector<8x64xf32>
    %75 = vector.extract_strided_slice %71 {offsets = [0, 64], sizes = [8, 64], strides = [1, 1]} : vector<8x192xf32> to vector<8x64xf32>
    %76 = vector.extract_strided_slice %71 {offsets = [0, 128], sizes = [8, 64], strides = [1, 1]} : vector<8x192xf32> to vector<8x64xf32>
    %77 = arith.mulf %75, %38 : vector<8x64xf32>
    %78 = arith.mulf %74, %73 : vector<8x64xf32>
    %79 = arith.addf %77, %78 : vector<8x64xf32>
    %80 = math.tanh %79 : vector<8x64xf32>
    %81 = arith.mulf %76, %80 : vector<8x64xf32>
    %82 = tpu.concatenate %81, %60 in 1 : vector<8x64xf32>, vector<8x64xf32> -> vector<8x128xf32>
    %83 = arith.truncf %82 : vector<8x128xf32> to vector<8x128xbf16>
    %cst_27 = arith.constant dense<0.000000e+00> : vector<8x256xf32>
    %84 = tpu.matmul %83, %12, %cst_27 {dimension_numbers = #tpu.dot_dimension_numbers<[1], [0], [0], [1], [0, 0, 1, 1], [], []>} : vector<8x128xbf16>, vector<128x256xbf16>, vector<8x256xf32> -> vector<8x256xf32>
    %85 = arith.addf %84, %15 : vector<8x256xf32>
    %86 = vector.extract_strided_slice %85 {offsets = [0, 0], sizes = [8, 192], strides = [1, 1]} : vector<8x256xf32> to vector<8x192xf32>
    %87 = arith.negf %86 : vector<8x192xf32>
    %88 = math.exp %87 : vector<8x192xf32>
    %cst_28 = arith.constant 1.000000e+00 : f32
    %89 = vector.broadcast %cst_28 : f32 to vector<8x192xf32>
    %90 = arith.addf %89, %88 : vector<8x192xf32>
    %91 = arith.divf %89, %90 : vector<8x192xf32>
    %92 = vector.extract_strided_slice %85 {offsets = [0, 192], sizes = [8, 64], strides = [1, 1]} : vector<8x256xf32> to vector<8x64xf32>
    %93 = math.tanh %92 : vector<8x64xf32>
    %94 = vector.extract_strided_slice %91 {offsets = [0, 0], sizes = [8, 64], strides = [1, 1]} : vector<8x192xf32> to vector<8x64xf32>
    %95 = vector.extract_strided_slice %91 {offsets = [0, 64], sizes = [8, 64], strides = [1, 1]} : vector<8x192xf32> to vector<8x64xf32>
    %96 = vector.extract_strided_slice %91 {offsets = [0, 128], sizes = [8, 64], strides = [1, 1]} : vector<8x192xf32> to vector<8x64xf32>
    %97 = arith.mulf %95, %58 : vector<8x64xf32>
    %98 = arith.mulf %94, %93 : vector<8x64xf32>
    %99 = arith.addf %97, %98 : vector<8x64xf32>
    %100 = math.tanh %99 : vector<8x64xf32>
    %101 = arith.mulf %96, %100 : vector<8x64xf32>
    %102 = vector.extract_strided_slice %10 {offsets = [2, 0, 0], sizes = [1, 8, 256], strides = [1, 1, 1]} : vector<4x8x256xf32> to vector<1x8x256xf32>
    %103 = vector.shape_cast %102 : vector<1x8x256xf32> to vector<8x256xf32>
    %104 = arith.truncf %81 : vector<8x64xf32> to vector<8x64xbf16>
    %cst_29 = arith.constant dense<0.000000e+00> : vector<8x256xf32>
    %105 = tpu.matmul %104, %11, %cst_29 {dimension_numbers = #tpu.dot_dimension_numbers<[1], [0], [0], [1], [0, 0, 1, 1], [], []>} : vector<8x64xbf16>, vector<64x256xbf16>, vector<8x256xf32> -> vector<8x256xf32>
    %106 = arith.addf %103, %105 : vector<8x256xf32>
    %107 = vector.extract_strided_slice %106 {offsets = [0, 0], sizes = [8, 192], strides = [1, 1]} : vector<8x256xf32> to vector<8x192xf32>
    %108 = arith.negf %107 : vector<8x192xf32>
    %109 = math.exp %108 : vector<8x192xf32>
    %cst_30 = arith.constant 1.000000e+00 : f32
    %110 = vector.broadcast %cst_30 : f32 to vector<8x192xf32>
    %111 = arith.addf %110, %109 : vector<8x192xf32>
    %112 = arith.divf %110, %111 : vector<8x192xf32>
    %113 = vector.extract_strided_slice %106 {offsets = [0, 192], sizes = [8, 64], strides = [1, 1]} : vector<8x256xf32> to vector<8x64xf32>
    %114 = math.tanh %113 : vector<8x64xf32>
    %115 = vector.extract_strided_slice %112 {offsets = [0, 0], sizes = [8, 64], strides = [1, 1]} : vector<8x192xf32> to vector<8x64xf32>
    %116 = vector.extract_strided_slice %112 {offsets = [0, 64], sizes = [8, 64], strides = [1, 1]} : vector<8x192xf32> to vector<8x64xf32>
    %117 = vector.extract_strided_slice %112 {offsets = [0, 128], sizes = [8, 64], strides = [1, 1]} : vector<8x192xf32> to vector<8x64xf32>
    %118 = arith.mulf %116, %79 : vector<8x64xf32>
    %119 = arith.mulf %115, %114 : vector<8x64xf32>
    %120 = arith.addf %118, %119 : vector<8x64xf32>
    %121 = math.tanh %120 : vector<8x64xf32>
    %122 = arith.mulf %117, %121 : vector<8x64xf32>
    %123 = tpu.concatenate %122, %101 in 1 : vector<8x64xf32>, vector<8x64xf32> -> vector<8x128xf32>
    %124 = arith.truncf %123 : vector<8x128xf32> to vector<8x128xbf16>
    %cst_31 = arith.constant dense<0.000000e+00> : vector<8x256xf32>
    %125 = tpu.matmul %124, %12, %cst_31 {dimension_numbers = #tpu.dot_dimension_numbers<[1], [0], [0], [1], [0, 0, 1, 1], [], []>} : vector<8x128xbf16>, vector<128x256xbf16>, vector<8x256xf32> -> vector<8x256xf32>
    %126 = arith.addf %125, %15 : vector<8x256xf32>
    %127 = vector.extract_strided_slice %126 {offsets = [0, 0], sizes = [8, 192], strides = [1, 1]} : vector<8x256xf32> to vector<8x192xf32>
    %128 = arith.negf %127 : vector<8x192xf32>
    %129 = math.exp %128 : vector<8x192xf32>
    %cst_32 = arith.constant 1.000000e+00 : f32
    %130 = vector.broadcast %cst_32 : f32 to vector<8x192xf32>
    %131 = arith.addf %130, %129 : vector<8x192xf32>
    %132 = arith.divf %130, %131 : vector<8x192xf32>
    %133 = vector.extract_strided_slice %126 {offsets = [0, 192], sizes = [8, 64], strides = [1, 1]} : vector<8x256xf32> to vector<8x64xf32>
    %134 = math.tanh %133 : vector<8x64xf32>
    %135 = vector.extract_strided_slice %132 {offsets = [0, 0], sizes = [8, 64], strides = [1, 1]} : vector<8x192xf32> to vector<8x64xf32>
    %136 = vector.extract_strided_slice %132 {offsets = [0, 64], sizes = [8, 64], strides = [1, 1]} : vector<8x192xf32> to vector<8x64xf32>
    %137 = vector.extract_strided_slice %132 {offsets = [0, 128], sizes = [8, 64], strides = [1, 1]} : vector<8x192xf32> to vector<8x64xf32>
    %138 = arith.mulf %136, %99 : vector<8x64xf32>
    %139 = arith.mulf %135, %134 : vector<8x64xf32>
    %140 = arith.addf %138, %139 : vector<8x64xf32>
    %141 = math.tanh %140 : vector<8x64xf32>
    %142 = arith.mulf %137, %141 : vector<8x64xf32>
    %143 = vector.extract_strided_slice %10 {offsets = [3, 0, 0], sizes = [1, 8, 256], strides = [1, 1, 1]} : vector<4x8x256xf32> to vector<1x8x256xf32>
    %144 = vector.shape_cast %143 : vector<1x8x256xf32> to vector<8x256xf32>
    %145 = arith.truncf %122 : vector<8x64xf32> to vector<8x64xbf16>
    %cst_33 = arith.constant dense<0.000000e+00> : vector<8x256xf32>
    %146 = tpu.matmul %145, %11, %cst_33 {dimension_numbers = #tpu.dot_dimension_numbers<[1], [0], [0], [1], [0, 0, 1, 1], [], []>} : vector<8x64xbf16>, vector<64x256xbf16>, vector<8x256xf32> -> vector<8x256xf32>
    %147 = arith.addf %144, %146 : vector<8x256xf32>
    %148 = vector.extract_strided_slice %147 {offsets = [0, 0], sizes = [8, 192], strides = [1, 1]} : vector<8x256xf32> to vector<8x192xf32>
    %149 = arith.negf %148 : vector<8x192xf32>
    %150 = math.exp %149 : vector<8x192xf32>
    %cst_34 = arith.constant 1.000000e+00 : f32
    %151 = vector.broadcast %cst_34 : f32 to vector<8x192xf32>
    %152 = arith.addf %151, %150 : vector<8x192xf32>
    %153 = arith.divf %151, %152 : vector<8x192xf32>
    %154 = vector.extract_strided_slice %147 {offsets = [0, 192], sizes = [8, 64], strides = [1, 1]} : vector<8x256xf32> to vector<8x64xf32>
    %155 = math.tanh %154 : vector<8x64xf32>
    %156 = vector.extract_strided_slice %153 {offsets = [0, 0], sizes = [8, 64], strides = [1, 1]} : vector<8x192xf32> to vector<8x64xf32>
    %157 = vector.extract_strided_slice %153 {offsets = [0, 64], sizes = [8, 64], strides = [1, 1]} : vector<8x192xf32> to vector<8x64xf32>
    %158 = vector.extract_strided_slice %153 {offsets = [0, 128], sizes = [8, 64], strides = [1, 1]} : vector<8x192xf32> to vector<8x64xf32>
    %159 = arith.mulf %157, %120 : vector<8x64xf32>
    %160 = arith.mulf %156, %155 : vector<8x64xf32>
    %161 = arith.addf %159, %160 : vector<8x64xf32>
    %162 = math.tanh %161 : vector<8x64xf32>
    %163 = arith.mulf %158, %162 : vector<8x64xf32>
    %164 = tpu.concatenate %163, %142 in 1 : vector<8x64xf32>, vector<8x64xf32> -> vector<8x128xf32>
    %165 = arith.truncf %164 : vector<8x128xf32> to vector<8x128xbf16>
    %cst_35 = arith.constant dense<0.000000e+00> : vector<8x256xf32>
    %166 = tpu.matmul %165, %12, %cst_35 {dimension_numbers = #tpu.dot_dimension_numbers<[1], [0], [0], [1], [0, 0, 1, 1], [], []>} : vector<8x128xbf16>, vector<128x256xbf16>, vector<8x256xf32> -> vector<8x256xf32>
    %167 = arith.addf %166, %15 : vector<8x256xf32>
    %168 = vector.extract_strided_slice %167 {offsets = [0, 0], sizes = [8, 192], strides = [1, 1]} : vector<8x256xf32> to vector<8x192xf32>
    %169 = arith.negf %168 : vector<8x192xf32>
    %170 = math.exp %169 : vector<8x192xf32>
    %cst_36 = arith.constant 1.000000e+00 : f32
    %171 = vector.broadcast %cst_36 : f32 to vector<8x192xf32>
    %172 = arith.addf %171, %170 : vector<8x192xf32>
    %173 = arith.divf %171, %172 : vector<8x192xf32>
    %174 = vector.extract_strided_slice %167 {offsets = [0, 192], sizes = [8, 64], strides = [1, 1]} : vector<8x256xf32> to vector<8x64xf32>
    %175 = math.tanh %174 : vector<8x64xf32>
    %176 = vector.extract_strided_slice %173 {offsets = [0, 0], sizes = [8, 64], strides = [1, 1]} : vector<8x192xf32> to vector<8x64xf32>
    %177 = vector.extract_strided_slice %173 {offsets = [0, 64], sizes = [8, 64], strides = [1, 1]} : vector<8x192xf32> to vector<8x64xf32>
    %178 = vector.extract_strided_slice %173 {offsets = [0, 128], sizes = [8, 64], strides = [1, 1]} : vector<8x192xf32> to vector<8x64xf32>
    %179 = arith.mulf %177, %140 : vector<8x64xf32>
    %180 = arith.mulf %176, %175 : vector<8x64xf32>
    %181 = arith.addf %179, %180 : vector<8x64xf32>
    %182 = math.tanh %181 : vector<8x64xf32>
    %183 = arith.mulf %178, %182 : vector<8x64xf32>
    %c0_37 = arith.constant 0 : index
    %c0_38 = arith.constant 0 : index
    %184 = vector.load %arg12[%c0_37, %c0_38] : memref<8x64xf32, #tpu.memory_space<vmem>>, vector<8x64xf32>
    tpu.vector_store %arg12[%c0_37, %c0_38], %163 {strides = array<i32>} : memref<8x64xf32, #tpu.memory_space<vmem>>, vector<8x64xf32>,
    %c0_39 = arith.constant 0 : index
    %c0_40 = arith.constant 0 : index
    %185 = vector.load %arg13[%c0_39, %c0_40] : memref<8x64xf32, #tpu.memory_space<vmem>>, vector<8x64xf32>
    tpu.vector_store %arg13[%c0_39, %c0_40], %161 {strides = array<i32>} : memref<8x64xf32, #tpu.memory_space<vmem>>, vector<8x64xf32>,
    %c0_41 = arith.constant 0 : index
    %c0_42 = arith.constant 0 : index
    %186 = vector.load %arg14[%c0_41, %c0_42] : memref<8x64xf32, #tpu.memory_space<vmem>>, vector<8x64xf32>
    tpu.vector_store %arg14[%c0_41, %c0_42], %183 {strides = array<i32>} : memref<8x64xf32, #tpu.memory_space<vmem>>, vector<8x64xf32>,
    %c0_43 = arith.constant 0 : index
    %c0_44 = arith.constant 0 : index
    %187 = vector.load %arg15[%c0_43, %c0_44] : memref<8x64xf32, #tpu.memory_space<vmem>>, vector<8x64xf32>
    tpu.vector_store %arg15[%c0_43, %c0_44], %181 {strides = array<i32>} : memref<8x64xf32, #tpu.memory_space<vmem>>, vector<8x64xf32>,
    %c1_i32 = arith.constant 1 : i32
    %188 = arith.cmpi eq, %arg0, %c1_i32 : i32
    %189 = arith.extui %188 : i1 to i32
    %c0_i32_45 = arith.constant 0 : i32
    %190 = arith.cmpi ne, %189, %c0_i32_45 : i32
    scf.if %190 {
      %191 = arith.truncf %183 : vector<8x64xf32> to vector<8x64xbf16>
      %c0_46 = arith.constant 0 : index
      %c0_47 = arith.constant 0 : index
      %192 = vector.load %arg7[%c0_46, %c0_47] : memref<64x32xbf16, #tpu.memory_space<vmem>>, vector<64x32xbf16>
      %cst_48 = arith.constant dense<0.000000e+00> : vector<8x32xf32>
      %193 = tpu.matmul %191, %192, %cst_48 {dimension_numbers = #tpu.dot_dimension_numbers<[1], [0], [0], [1], [0, 0, 1, 1], [], []>} : vector<8x64xbf16>, vector<64x32xbf16>, vector<8x32xf32> -> vector<8x32xf32>
      %c0_49 = arith.constant 0 : index
      %c0_50 = arith.constant 0 : index
      %194 = vector.load %arg8[%c0_49, %c0_50] : memref<1x32xf32, #tpu.memory_space<vmem>>, vector<1x32xf32>
      %195 = vector.broadcast %194 : vector<1x32xf32> to vector<8x32xf32>
      %196 = arith.addf %193, %195 : vector<8x32xf32>
      %cst_51 = arith.constant 0.000000e+00 : f32
      %197 = vector.broadcast %cst_51 : f32 to vector<8x32xf32>
      %198 = arith.maximumf %196, %197 : vector<8x32xf32>
      %199 = arith.truncf %198 : vector<8x32xf32> to vector<8x32xbf16>
      %c0_52 = arith.constant 0 : index
      %c0_53 = arith.constant 0 : index
      %200 = vector.load %arg9[%c0_52, %c0_53] : memref<32x1xbf16, #tpu.memory_space<vmem>>, vector<32x1xbf16>
      %cst_54 = arith.constant dense<0.000000e+00> : vector<8x1xf32>
      %201 = tpu.matmul %199, %200, %cst_54 {dimension_numbers = #tpu.dot_dimension_numbers<[1], [0], [0], [1], [0, 0, 1, 1], [], []>} : vector<8x32xbf16>, vector<32x1xbf16>, vector<8x1xf32> -> vector<8x1xf32>
      %c0_55 = arith.constant 0 : index
      %c0_56 = arith.constant 0 : index
      %202 = vector.load %arg10[%c0_55, %c0_56] : memref<1x1xf32, #tpu.memory_space<vmem>>, vector<1x1xf32>
      %203 = vector.broadcast %202 : vector<1x1xf32> to vector<8x1xf32>
      %204 = arith.addf %201, %203 : vector<8x1xf32>
      %205 = arith.negf %204 : vector<8x1xf32>
      %206 = math.exp %205 : vector<8x1xf32>
      %cst_57 = arith.constant 1.000000e+00 : f32
      %207 = vector.broadcast %cst_57 : f32 to vector<8x1xf32>
      %208 = arith.addf %207, %206 : vector<8x1xf32>
      %209 = arith.divf %207, %208 : vector<8x1xf32>
      %c0_58 = arith.constant 0 : index
      %c0_59 = arith.constant 0 : index
      %210 = vector.load %arg11[%c0_58, %c0_59] : memref<8x1xf32, #tpu.memory_space<vmem>>, vector<8x1xf32>
      tpu.vector_store %arg11[%c0_58, %c0_59], %209 {strides = array<i32>} : memref<8x1xf32, #tpu.memory_space<vmem>>, vector<8x1xf32>,
    } else {
    }
    return
  }
  func.func @transform_0(%arg0: i32) -> (i32, i32, i32) {
    %c0_i32 = arith.constant 0 : i32
    %c0_i32_0 = arith.constant 0 : i32
    %c0_i32_1 = arith.constant 0 : i32
    return %arg0, %c0_i32, %c0_i32_0 : i32, i32, i32
  }
  func.func @transform_1(%arg0: i32) -> (i32, i32) {
    %c0_i32 = arith.constant 0 : i32
    %c0_i32_0 = arith.constant 0 : i32
    %c0_i32_1 = arith.constant 0 : i32
    return %c0_i32, %c0_i32_0 : i32, i32
  }
  func.func @transform_2(%arg0: i32) -> (i32, i32) {
    %c0_i32 = arith.constant 0 : i32
    %c0_i32_0 = arith.constant 0 : i32
    %c0_i32_1 = arith.constant 0 : i32
    return %c0_i32, %c0_i32_0 : i32, i32
  }
  func.func @transform_3(%arg0: i32) -> (i32, i32) {
    %c0_i32 = arith.constant 0 : i32
    %c0_i32_0 = arith.constant 0 : i32
    %c0_i32_1 = arith.constant 0 : i32
    return %c0_i32, %c0_i32_0 : i32, i32
  }
  func.func @transform_4(%arg0: i32) -> (i32, i32) {
    %c0_i32 = arith.constant 0 : i32
    %c0_i32_0 = arith.constant 0 : i32
    %c0_i32_1 = arith.constant 0 : i32
    return %c0_i32, %c0_i32_0 : i32, i32
  }
  func.func @transform_5(%arg0: i32) -> (i32, i32) {
    %c0_i32 = arith.constant 0 : i32
    %c0_i32_0 = arith.constant 0 : i32
    %c0_i32_1 = arith.constant 0 : i32
    return %c0_i32, %c0_i32_0 : i32, i32
  }
  func.func @transform_6(%arg0: i32) -> (i32, i32) {
    %c0_i32 = arith.constant 0 : i32
    %c0_i32_0 = arith.constant 0 : i32
    %c0_i32_1 = arith.constant 0 : i32
    return %c0_i32, %c0_i32_0 : i32, i32
  }
  func.func @transform_7(%arg0: i32) -> (i32, i32) {
    %c0_i32 = arith.constant 0 : i32
    %c0_i32_0 = arith.constant 0 : i32
    %c0_i32_1 = arith.constant 0 : i32
    return %c0_i32, %c0_i32_0 : i32, i32
  }
  func.func @transform_8(%arg0: i32) -> (i32, i32) {
    %c0_i32 = arith.constant 0 : i32
    %c0_i32_0 = arith.constant 0 : i32
    %c0_i32_1 = arith.constant 0 : i32
    return %c0_i32, %c0_i32_0 : i32, i32
  }
  func.func @transform_9(%arg0: i32) -> (i32, i32) {
    %c0_i32 = arith.constant 0 : i32
    %c0_i32_0 = arith.constant 0 : i32
    %c0_i32_1 = arith.constant 0 : i32
    return %c0_i32, %c0_i32_0 : i32, i32
  }
  func.func @transform_10(%arg0: i32) -> (i32, i32) {
    %c0_i32 = arith.constant 0 : i32
    %c0_i32_0 = arith.constant 0 : i32
    %c0_i32_1 = arith.constant 0 : i32
    return %c0_i32, %c0_i32_0 : i32, i32
  }
}

</mosaic_0001>

<llo_original>
// kernel: tpu_custom_call.1
$region0: #{tpu_custom_call.1}
  #allocation0 [shape = 'u32[]', space=smem, size = 0x4, offset = 0x4, fixed_abs, tag = 'smem constant byte address 0x4 - core index']
  #allocation1 [shape = 'u32[144,128]{1,0:T(1,128)}', space=vmem, size = 0x12000, scoped, tag = 'internal scratch']
  #allocation2 [shape = 'f32[8,64]{1,0:T(8,128)}', space=vmem, size = 0x1000, scoped, tag = 'scratch operand']
  #allocation3 [shape = 'f32[8,64]{1,0:T(8,128)}', space=vmem, size = 0x1000, scoped, tag = 'scratch operand']
  #allocation4 [shape = 'f32[8,64]{1,0:T(8,128)}', space=vmem, size = 0x1000, scoped, tag = 'scratch operand']
  #allocation5 [shape = 'f32[8,64]{1,0:T(8,128)}', space=vmem, size = 0x1000, scoped, tag = 'scratch operand']
  #allocation6 [shape = 'f32[1,1]{1,0:T(1,128)S(1)}', space=vmem, size = 0x200, scoped, tag = 'scoped memory for tpu_custom_call.1']
  %s0 = inlined_call_operand.hbm [shape: bf16[8,8,16], index: 0, kind: input, shape index: {}]
  %s1 = inlined_call_operand.hbm [shape: bf16[16,256], index: 1, kind: input, shape index: {}]
  %s2 = inlined_call_operand.vmem [shape: bf16[64,256], index: 2, kind: input, shape index: {}]
  %s3 = inlined_call_operand.vmem [shape: f32[1,256], index: 3, kind: input, shape index: {}]
  %s4 = inlined_call_operand.hbm [shape: bf16[128,256], index: 4, kind: input, shape index: {}]
  %s5 = inlined_call_operand.vmem [shape: f32[1,256], index: 5, kind: input, shape index: {}]
  %s6 = inlined_call_operand.vmem [shape: bf16[64,32], index: 6, kind: input, shape index: {}]
  %s7 = inlined_call_operand.vmem [shape: f32[1,32], index: 7, kind: input, shape index: {}]
  %s8 = inlined_call_operand.vmem [shape: bf16[32,1], index: 8, kind: input, shape index: {}]
  %s9 = inlined_call_operand.<no memory space> [shape: f32[1,1], index: 9, kind: input, shape index: {}]
  %s10 = inlined_call_operand.vmem [shape: f32[8,1], index: 10, kind: output, shape index: {}]
  %s11 = sld [smem:[#allocation0]]
  $region93: #{tpu_custom_call.1} parent=0
    _
  %s13 = ssub.s32 1, %s11
  %s14 = scalar_select 0, %s13, %s11
  %v15 = vstv %s9
  %16 = vst [vmem:[#allocation6] sm:$0x1] %v15
  $region1: #{tpu_custom_call.1} parent=0
    #allocation7 [shape = 'u8[16384]{0}', space=vmem, size = 0x4000, scoped, tag = 'input window, operand 0']
    #allocation8 [shape = 's32[2]{0}', space=sflag, size = 0x8, scoped, tag = 'scoped memory for tpu_custom_call.1']
    #allocation9 [shape = 'u8[8192]{0}', space=vmem, size = 0x2000, scoped, tag = 'input window, operand 1, single buffered']
    #allocation10 [shape = 's32[1]{0}', space=sflag, size = 0x4, scoped, tag = 'scoped memory for tpu_custom_call.1']
    #allocation11 [shape = 'u8[65536]{0}', space=vmem, size = 0x10000, scoped, tag = 'input window, operand 4, single buffered']
    %17 = vsyncpa [#allocation8], 0
    %s18 = scalar_lea.sflag [#allocation8], 1
    %19 = vsyncpa %s18, 0
    %20 = vsyncpa [#allocation10], 0
    loop: start=0, step=1, limit=4
    $region2: #{tpu_custom_call.1} parent=1 // loop_pre_header
      _
    $region3: #{tpu_custom_call.1} parent=1 // loop_header
      %s22 = sphi 0, %s26
      %p23 = scmp.ge.s32.totalorder %s22, 4
      %s32 = sphi 0, %s34
      %s35 = sphi 0, %s32
      %s36 = sphi 0, %s35
      %s52 = sphi 0, %s36
      %s56 = sphi 0, %s56
      %s58 = sphi 0, %s56
      %s59 = sphi 0, %s58
      %s73 = sphi 0, %s59
      %s77 = sphi 0, %s77
      %s79 = sphi 0, %s77
      %s80 = sphi 0, %s79
      %s94 = sphi 0, %s80
      %s98 = sphi 0, %s98
      %s100 = sphi 0, %s98
      %s101 = sphi 0, %s100
      %s115 = sphi 0, %s101
      %s119 = sphi 0, %s119
      %s121 = sphi 0, %s119
      %s122 = sphi 0, %s121
      %s136 = sphi 0, %s122
      %s140 = sphi 0, %s140
      %s142 = sphi 0, %s140
      %s143 = sphi 0, %s142
      %s157 = sphi 0, %s143
      %s161 = sphi 0, %s161
      %s163 = sphi 0, %s161
      %s164 = sphi 0, %s163
      %s178 = sphi 0, %s164
      %s182 = sphi 0, %s182
      %s184 = sphi 0, %s182
      %s185 = sphi 0, %s184
      %s199 = sphi 0, %s185
      %s203 = sphi 0, %s203
      %s205 = sphi 0, %s203
      %s206 = sphi 0, %s205
      %s220 = sphi 0, %s206
      %s224 = sphi 0, %s224
      %s226 = sphi 0, %s224
      %s227 = sphi 0, %s226
      %s241 = sphi 0, %s227
      %s245 = sphi 0, %s245
      %s247 = sphi 0, %s245
      %s248 = sphi 0, %s247
      %s262 = sphi 0, %s248
    $region4: #{tpu_custom_call.1} parent=1 // loop_header_branch
      %25 = sbr.rel (%p23) target = $region8
    $region5: #{tpu_custom_call.1} parent=1 // loop_body
      %s27 = ssub.s32 %s22, 1
      %s28 = ssub.s32 %s22, 2
      %s29 = sadd.s32 %s22, 1
      %s30 = ssub.s32 %s22, %s29
      %p31 = scmp.eq.s32.totalorder %s30, 0
      %s33 = sadd.s32 %s32, 1
      %s34 = scalar_select %p31, %s32, %s33
      %p37 = pneg %p31
      %p38 = scmp.eq.s32.totalorder %s22, 1
      %p39 = por %p37, %p38
      %p40 = scmp.ne.s32.totalorder %s32, %s35
      %p41 = scmp.eq.s32.totalorder %s22, 0
      %p42 = por %p40, %p41
      %p43 = scmp.ne.s32.totalorder %s32, %s35
      %p44 = scmp.eq.s32.totalorder %s27, 1
      %p45 = por %p43, %p44
      %p46 = scmp.ne.s32.totalorder %s35, %s36
      %p47 = scmp.eq.s32.totalorder %s27, 0
      %p48 = por %p46, %p47
      %p49 = scmp.ne.s32.totalorder %s35, %s36
      %p50 = scmp.eq.s32.totalorder %s28, 1
      %p51 = por %p49, %p50
      %p53 = scmp.ne.s32.totalorder %s36, %s52
      %p54 = scmp.eq.s32.totalorder %s28, 0
      %p55 = por %p53, %p54
      %s57 = sadd.s32 %s56, 1
      %p60 = scmp.eq.s32.totalorder %s22, 1
      %p61 = scmp.ne.s32.totalorder %s56, %s58
      %p62 = scmp.eq.s32.totalorder %s22, 0
      %p63 = por %p61, %p62
      %p64 = scmp.ne.s32.totalorder %s56, %s58
      %p65 = scmp.eq.s32.totalorder %s27, 1
      %p66 = por %p64, %p65
      %p67 = scmp.ne.s32.totalorder %s58, %s59
      %p68 = scmp.eq.s32.totalorder %s27, 0
      %p69 = por %p67, %p68
      %p70 = scmp.ne.s32.totalorder %s58, %s59
      %p71 = scmp.eq.s32.totalorder %s28, 1
      %p72 = por %p70, %p71
      %p74 = scmp.ne.s32.totalorder %s59, %s73
      %p75 = scmp.eq.s32.totalorder %s28, 0
      %p76 = por %p74, %p75
      %s78 = sadd.s32 %s77, 1
      %p81 = scmp.eq.s32.totalorder %s22, 1
      %p82 = scmp.ne.s32.totalorder %s77, %s79
      %p83 = scmp.eq.s32.totalorder %s22, 0
      %p84 = por %p82, %p83
      %p85 = scmp.ne.s32.totalorder %s77, %s79
      %p86 = scmp.eq.s32.totalorder %s27, 1
      %p87 = por %p85, %p86
      %p88 = scmp.ne.s32.totalorder %s79, %s80
      %p89 = scmp.eq.s32.totalorder %s27, 0
      %p90 = por %p88, %p89
      %p91 = scmp.ne.s32.totalorder %s79, %s80
      %p92 = scmp.eq.s32.totalorder %s28, 1
      %p93 = por %p91, %p92
      %p95 = scmp.ne.s32.totalorder %s80, %s94
      %p96 = scmp.eq.s32.totalorder %s28, 0
      %p97 = por %p95, %p96
      %s99 = sadd.s32 %s98, 1
      %p102 = scmp.eq.s32.totalorder %s22, 1
      %p103 = scmp.ne.s32.totalorder %s98, %s100
      %p104 = scmp.eq.s32.totalorder %s22, 0
      %p105 = por %p103, %p104
      %p106 = scmp.ne.s32.totalorder %s98, %s100
      %p107 = scmp.eq.s32.totalorder %s27, 1
      %p108 = por %p106, %p107
      %p109 = scmp.ne.s32.totalorder %s100, %s101
      %p110 = scmp.eq.s32.totalorder %s27, 0
      %p111 = por %p109, %p110
      %p112 = scmp.ne.s32.totalorder %s100, %s101
      %p113 = scmp.eq.s32.totalorder %s28, 1
      %p114 = por %p112, %p113
      %p116 = scmp.ne.s32.totalorder %s101, %s115
      %p117 = scmp.eq.s32.totalorder %s28, 0
      %p118 = por %p116, %p117
      %s120 = sadd.s32 %s119, 1
      %p123 = scmp.eq.s32.totalorder %s22, 1
      %p124 = scmp.ne.s32.totalorder %s119, %s121
      %p125 = scmp.eq.s32.totalorder %s22, 0
      %p126 = por %p124, %p125
      %p127 = scmp.ne.s32.totalorder %s119, %s121
      %p128 = scmp.eq.s32.totalorder %s27, 1
      %p129 = por %p127, %p128
      %p130 = scmp.ne.s32.totalorder %s121, %s122
      %p131 = scmp.eq.s32.totalorder %s27, 0
      %p132 = por %p130, %p131
      %p133 = scmp.ne.s32.totalorder %s121, %s122
      %p134 = scmp.eq.s32.totalorder %s28, 1
      %p135 = por %p133, %p134
      %p137 = scmp.ne.s32.totalorder %s122, %s136
      %p138 = scmp.eq.s32.totalorder %s28, 0
      %p139 = por %p137, %p138
      %s141 = sadd.s32 %s140, 1
      %p144 = scmp.eq.s32.totalorder %s22, 1
      %p145 = scmp.ne.s32.totalorder %s140, %s142
      %p146 = scmp.eq.s32.totalorder %s22, 0
      %p147 = por %p145, %p146
      %p148 = scmp.ne.s32.totalorder %s140, %s142
      %p149 = scmp.eq.s32.totalorder %s27, 1
      %p150 = por %p148, %p149
      %p151 = scmp.ne.s32.totalorder %s142, %s143
      %p152 = scmp.eq.s32.totalorder %s27, 0
      %p153 = por %p151, %p152
      %p154 = scmp.ne.s32.totalorder %s142, %s143
      %p155 = scmp.eq.s32.totalorder %s28, 1
      %p156 = por %p154, %p155
      %p158 = scmp.ne.s32.totalorder %s143, %s157
      %p159 = scmp.eq.s32.totalorder %s28, 0
      %p160 = por %p158, %p159
      %s162 = sadd.s32 %s161, 1
      %p165 = scmp.eq.s32.totalorder %s22, 1
      %p166 = scmp.ne.s32.totalorder %s161, %s163
      %p167 = scmp.eq.s32.totalorder %s22, 0
      %p168 = por %p166, %p167
      %p169 = scmp.ne.s32.totalorder %s161, %s163
      %p170 = scmp.eq.s32.totalorder %s27, 1
      %p171 = por %p169, %p170
      %p172 = scmp.ne.s32.totalorder %s163, %s164
      %p173 = scmp.eq.s32.totalorder %s27, 0
      %p174 = por %p172, %p173
      %p175 = scmp.ne.s32.totalorder %s163, %s164
      %p176 = scmp.eq.s32.totalorder %s28, 1
      %p177 = por %p175, %p176
      %p179 = scmp.ne.s32.totalorder %s164, %s178
      %p180 = scmp.eq.s32.totalorder %s28, 0
      %p181 = por %p179, %p180
      %s183 = sadd.s32 %s182, 1
      %p186 = scmp.eq.s32.totalorder %s22, 1
      %p187 = scmp.ne.s32.totalorder %s182, %s184
      %p188 = scmp.eq.s32.totalorder %s22, 0
      %p189 = por %p187, %p188
      %p190 = scmp.ne.s32.totalorder %s182, %s184
      %p191 = scmp.eq.s32.totalorder %s27, 1
      %p192 = por %p190, %p191
      %p193 = scmp.ne.s32.totalorder %s184, %s185
      %p194 = scmp.eq.s32.totalorder %s27, 0
      %p195 = por %p193, %p194
      %p196 = scmp.ne.s32.totalorder %s184, %s185
      %p197 = scmp.eq.s32.totalorder %s28, 1
      %p198 = por %p196, %p197
      %p200 = scmp.ne.s32.totalorder %s185, %s199
      %p201 = scmp.eq.s32.totalorder %s28, 0
      %p202 = por %p200, %p201
      %s204 = sadd.s32 %s203, 1
      %p207 = scmp.eq.s32.totalorder %s22, 1
      %p208 = scmp.ne.s32.totalorder %s203, %s205
      %p209 = scmp.eq.s32.totalorder %s22, 0
      %p210 = por %p208, %p209
      %p211 = scmp.ne.s32.totalorder %s203, %s205
      %p212 = scmp.eq.s32.totalorder %s27, 1
      %p213 = por %p211, %p212
      %p214 = scmp.ne.s32.totalorder %s205, %s206
      %p215 = scmp.eq.s32.totalorder %s27, 0
      %p216 = por %p214, %p215
      %p217 = scmp.ne.s32.totalorder %s205, %s206
      %p218 = scmp.eq.s32.totalorder %s28, 1
      %p219 = por %p217, %p218
      %p221 = scmp.ne.s32.totalorder %s206, %s220
      %p222 = scmp.eq.s32.totalorder %s28, 0
      %p223 = por %p221, %p222
      %s225 = sadd.s32 %s224, 1
      %p228 = scmp.eq.s32.totalorder %s22, 1
      %p229 = scmp.ne.s32.totalorder %s224, %s226
      %p230 = scmp.eq.s32.totalorder %s22, 0
      %p231 = por %p229, %p230
      %p232 = scmp.ne.s32.totalorder %s224, %s226
      %p233 = scmp.eq.s32.totalorder %s27, 1
      %p234 = por %p232, %p233
      %p235 = scmp.ne.s32.totalorder %s226, %s227
      %p236 = scmp.eq.s32.totalorder %s27, 0
      %p237 = por %p235, %p236
      %p238 = scmp.ne.s32.totalorder %s226, %s227
      %p239 = scmp.eq.s32.totalorder %s28, 1
      %p240 = por %p238, %p239
      %p242 = scmp.ne.s32.totalorder %s227, %s241
      %p243 = scmp.eq.s32.totalorder %s28, 0
      %p244 = por %p242, %p243
      %s246 = sadd.s32 %s245, 1
      %p249 = scmp.eq.s32.totalorder %s22, 1
      %p250 = scmp.ne.s32.totalorder %s245, %s247
      %p251 = scmp.eq.s32.totalorder %s22, 0
      %p252 = por %p250, %p251
      %p253 = scmp.ne.s32.totalorder %s245, %s247
      %p254 = scmp.eq.s32.totalorder %s27, 1
      %p255 = por %p253, %p254
      %p256 = scmp.ne.s32.totalorder %s247, %s248
      %p257 = scmp.eq.s32.totalorder %s27, 0
      %p258 = por %p256, %p257
      %p259 = scmp.ne.s32.totalorder %s247, %s248
      %p260 = scmp.eq.s32.totalorder %s28, 1
      %p261 = por %p259, %p260
      %p263 = scmp.ne.s32.totalorder %s248, %s262
      %p264 = scmp.eq.s32.totalorder %s28, 0
      %p265 = por %p263, %p264
      %p266 = scmp.le.s32.totalorder 1, %s22
      %p267 = scmp.lt.s32.totalorder %s22, 3
      %p268 = pnand %p266, %p267
      %p269 = pneg %p268
      // Predicated region
      $region9: #{tpu_custom_call.1} parent=5 // pred_check
        _
      $region10: #{tpu_custom_call.1} parent=5 // pred_check_branch
        %271 = sbr.rel (%p268) target = $region12
      $region11: #{tpu_custom_call.1} parent=5 // pred_region
        %s272 = ssub.s32 %s22, 1
        // Predicated region
        $region13: #{tpu_custom_call.1} parent=11 // pred_check
          %p273 = pneg %p69
        $region14: #{tpu_custom_call.1} parent=11 // pred_check_branch
          %275 = sbr.rel (%p273) target = $region16
        $region15: #{tpu_custom_call.1} parent=11 // pred_region
          %s277 = ssub.s32 256, 256
          %278 = vsyncadd [#allocation10], %s277
          %s279 = sshll.u32 [#allocation9], 4
          %s280 = int_to_ptr.vmem [resolvable:$true] %s279
          %285 = dma.hbm_to_vmem [thread:$0]  %s1, 256, %s280, [#allocation10], 128, 128, 8
        $region16: #{tpu_custom_call.1} parent=11 // pred_fallthru
          _
        // Predicated region
        $region17: #{tpu_custom_call.1} parent=11 // pred_check
          %p286 = pneg %p90
        $region18: #{tpu_custom_call.1} parent=11 // pred_check_branch
          %288 = sbr.rel (%p286) target = $region20
        $region19: #{tpu_custom_call.1} parent=11 // pred_region
          _
        $region20: #{tpu_custom_call.1} parent=11 // pred_fallthru
          _
        // Predicated region
        $region21: #{tpu_custom_call.1} parent=11 // pred_check
          %p289 = pneg %p111
        $region22: #{tpu_custom_call.1} parent=11 // pred_check_branch
          %291 = sbr.rel (%p289) target = $region24
        $region23: #{tpu_custom_call.1} parent=11 // pred_region
          _
        $region24: #{tpu_custom_call.1} parent=11 // pred_fallthru
          _
        // Predicated region
        $region25: #{tpu_custom_call.1} parent=11 // pred_check
          %p292 = pneg %p132
        $region26: #{tpu_custom_call.1} parent=11 // pred_check_branch
          %294 = sbr.rel (%p292) target = $region28
        $region27: #{tpu_custom_call.1} parent=11 // pred_region
          %s296 = ssub.s32 2048, 2048
          %297 = vsyncadd [#allocation10], %s296
          %s298 = sshll.u32 [#allocation11], 4
          %s299 = int_to_ptr.vmem [resolvable:$true] %s298
          %304 = dma.hbm_to_vmem [thread:$0]  %s4, 2048, %s299, [#allocation10], 128, 128, 8
        $region28: #{tpu_custom_call.1} parent=11 // pred_fallthru
          _
        // Predicated region
        $region29: #{tpu_custom_call.1} parent=11 // pred_check
          %p305 = pneg %p153
        $region30: #{tpu_custom_call.1} parent=11 // pred_check_branch
          %307 = sbr.rel (%p305) target = $region32
        $region31: #{tpu_custom_call.1} parent=11 // pred_region
          _
        $region32: #{tpu_custom_call.1} parent=11 // pred_fallthru
          _
        // Predicated region
        $region33: #{tpu_custom_call.1} parent=11 // pred_check
          %p308 = pneg %p174
        $region34: #{tpu_custom_call.1} parent=11 // pred_check_branch
          %310 = sbr.rel (%p308) target = $region36
        $region35: #{tpu_custom_call.1} parent=11 // pred_region
          _
        $region36: #{tpu_custom_call.1} parent=11 // pred_fallthru
          _
        // Predicated region
        $region37: #{tpu_custom_call.1} parent=11 // pred_check
          %p311 = pneg %p195
        $region38: #{tpu_custom_call.1} parent=11 // pred_check_branch
          %313 = sbr.rel (%p311) target = $region40
        $region39: #{tpu_custom_call.1} parent=11 // pred_region
          _
        $region40: #{tpu_custom_call.1} parent=11 // pred_fallthru
          _
        // Predicated region
        $region41: #{tpu_custom_call.1} parent=11 // pred_check
          %p314 = pneg %p216
        $region42: #{tpu_custom_call.1} parent=11 // pred_check_branch
          %316 = sbr.rel (%p314) target = $region44
        $region43: #{tpu_custom_call.1} parent=11 // pred_region
          _
        $region44: #{tpu_custom_call.1} parent=11 // pred_fallthru
          _
        // Predicated region
        $region45: #{tpu_custom_call.1} parent=11 // pred_check
          %p317 = pneg %p237
        $region46: #{tpu_custom_call.1} parent=11 // pred_check_branch
          %319 = sbr.rel (%p317) target = $region48
        $region47: #{tpu_custom_call.1} parent=11 // pred_region
          _
        $region48: #{tpu_custom_call.1} parent=11 // pred_fallthru
          _
      $region12: #{tpu_custom_call.1} parent=5 // pred_fallthru
        _
      %p320 = scmp.lt.s32.totalorder %s22, 2
      // Predicated region
      $region49: #{tpu_custom_call.1} parent=5 // pred_check
        %p321 = pneg %p320
      $region50: #{tpu_custom_call.1} parent=5 // pred_check_branch
        %323 = sbr.rel (%p321) target = $region52
      $region51: #{tpu_custom_call.1} parent=5 // pred_region
        // Predicated region
        $region53: #{tpu_custom_call.1} parent=51 // pred_check
          %p324 = pneg %p42
        $region54: #{tpu_custom_call.1} parent=51 // pred_check_branch
          %326 = sbr.rel (%p324) target = $region56
        $region55: #{tpu_custom_call.1} parent=51 // pred_region
          %s327 = sand.u32 %s32, 1
          %s328 = scalar_lea.sflag [#allocation8], %s327
          %s329 = sand.u32 %s32, 1
          %s330 = smul.addr %s329, 16
          %s331 = scalar_lea.vmem [#allocation7], %s330
          %s332 = smul.u32 4, %s22
          %s334 = ssub.s32 256, 256
          %335 = vsyncadd %s328, %s334
          %s336 = smul.addr %s332, 64
          %s337 = scalar_lea.hbm %s0, %s336
          %s338 = sshll.u32 %s331, 4
          %s339 = int_to_ptr.vmem [resolvable:$true] %s338
          %344 = dma.hbm_to_vmem [thread:$0]  %s337, 256, %s339, %s328, 64, 64, 4
        $region56: #{tpu_custom_call.1} parent=51 // pred_fallthru
          _
      $region52: #{tpu_custom_call.1} parent=5 // pred_fallthru
        _
      %p345 = scmp.le.s32.totalorder 1, %s22
      %p346 = scmp.lt.s32.totalorder %s22, 3
      %p347 = pnand %p345, %p346
      %p348 = pneg %p347
      // Predicated region
      $region57: #{tpu_custom_call.1} parent=5 // pred_check
        _
      $region58: #{tpu_custom_call.1} parent=5 // pred_check_branch
        %350 = sbr.rel (%p347) target = $region60
      $region59: #{tpu_custom_call.1} parent=5 // pred_region
        %s351 = ssub.s32 %s22, 1
        %s352 = sand.u32 %s35, 1
        %s353 = scalar_lea.sflag [#allocation8], %s352
        %s354 = sand.u32 %s35, 1
        %s355 = smul.addr %s354, 16
        %s356 = scalar_lea.vmem [#allocation7], %s355
        // Predicated region
        $region61: #{tpu_custom_call.1} parent=59 // pred_check
          %p357 = pneg %p48
        $region62: #{tpu_custom_call.1} parent=59 // pred_check_branch
          %359 = sbr.rel (%p357) target = $region64
        $region63: #{tpu_custom_call.1} parent=59 // pred_region
          %360 = dma.done %s353, 256
        $region64: #{tpu_custom_call.1} parent=59 // pred_fallthru
          _
        // Predicated region
        $region65: #{tpu_custom_call.1} parent=59 // pred_check
          %p361 = pneg %p69
        $region66: #{tpu_custom_call.1} parent=59 // pred_check_branch
          %363 = sbr.rel (%p361) target = $region68
        $region67: #{tpu_custom_call.1} parent=59 // pred_region
          %364 = dma.done [#allocation10], 256
        $region68: #{tpu_custom_call.1} parent=59 // pred_fallthru
          _
        // Predicated region
        $region69: #{tpu_custom_call.1} parent=59 // pred_check
          %p365 = pneg %p132
        $region70: #{tpu_custom_call.1} parent=59 // pred_check_branch
          %367 = sbr.rel (%p365) target = $region72
        $region71: #{tpu_custom_call.1} parent=59 // pred_region
          %368 = dma.done [#allocation10], 2048
        $region72: #{tpu_custom_call.1} parent=59 // pred_fallthru
          _
        %s369 = sand.u32 %s35, 1
        %s370 = scalar_lea.sflag [#allocation8], %s369
        %s371 = sand.u32 %s35, 1
        %s372 = smul.addr %s371, 16
        %s373 = scalar_lea.vmem [#allocation7], %s372
        %p374 = pneg %p48
        %p375 = pneg %p45
        %p376 = pneg %p69
        %p377 = pneg %p66
        %p378 = pneg %p90
        %p379 = pneg %p87
        %p380 = pneg %p111
        %p381 = pneg %p108
        %p382 = pneg %p132
        %p383 = pneg %p129
        %p384 = pneg %p153
        %p385 = pneg %p150
        %p386 = pneg %p174
        %p387 = pneg %p171
        %p388 = pneg %p195
        %p389 = pneg %p192
        %p390 = pneg %p216
        %p391 = pneg %p213
        %p392 = pneg %p237
        %p393 = pneg %p234
        %p394 = pneg %p258
        %p395 = pneg %p255
        %s396 = smul.u32 4, %s27
        %p398 = scmp.eq.s32.totalorder %s27, 0
        // Predicated region
        $region73: #{tpu_custom_call.1} parent=59 // pred_check
          %p399 = pneg %p398
        $region74: #{tpu_custom_call.1} parent=59 // pred_check_branch
          %401 = sbr.rel (%p399) target = $region76
        $region75: #{tpu_custom_call.1} parent=59 // pred_region
          %vm402 = vcmask 523264
          %403 = vst.msk [vmem:[#allocation2] sm:$0xff] %vm402, 0.0
          %404 = vst.msk [vmem:[#allocation3] sm:$0xff] %vm402, 0.0
          %405 = vst.msk [vmem:[#allocation4] sm:$0xff] %vm402, 0.0
          %406 = vst.msk [vmem:[#allocation5] sm:$0xff] %vm402, 0.0
        $region76: #{tpu_custom_call.1} parent=59 // pred_fallthru
          _
        %v407 = vld [vmem:[%s356] sm:$0xf]
        %v408 = vld [vmem:[%s356 + $0x4] sm:$0xf]
        %v409 = vld [vmem:[%s356 + $0x8] sm:$0xf]
        %v410 = vld [vmem:[%s356 + $0xc] sm:$0xf]
        %v411 = vld [vmem:[#allocation9] sm:$0xff]
        %v412 = vld [vmem:[#allocation9 + $0x8] sm:$0xff]
        %v413 = vld [vmem:[%s3] sm:$0x3]
        %v415 = vlaneseq
        %v416 = vshrl.u32 %v415, 7
        %v417 = vsub.s32 0, %v416
        %v418 = vrot.slane %v413, %v417
        %v419 = vlaneseq
        %v420 = vshrl.u32 %v419, 7
        %v421 = vsub.s32 1, %v420
        %v422 = vrot.slane %v413, %v421
        %v429 = vunpack.c.l.b16 %v407
        %v430 = vunpack.c.l.b16 %v408
        %v431 = vunpack.c.l.b16 %v409
        %v432 = vunpack.c.l.b16 %v410
        %v433 = vpack.c.b16 %v430, %v429
        %v434 = vpack.c.b16 %v432, %v431
        %v437 = vunpack.c.l.b16 %v411
        %v438 = vunpack.c.h.b16 %v411
        %v439 = vunpack.c.l.b16 %v412
        %v440 = vunpack.c.h.b16 %v412
        %v441 = vpack.c.b16 %v439, %v437
        %v442 = vpack.c.b16 %v440, %v438
        %vm445 = vcmask 130048
        %v447 = vsel %vm445, %v433, 0
        %v450 = vsel %vm445, %v434, 0
        %452 = vmatprep.subr.bf16.mxu0 0
        %453 = vmatpush1.bf16.msra.mxu0 0
        %454 = vmatprep.subr.bf16.mxu0 0
        %455 = vmatpush1.bf16.msra.mxu0 0
        %456 = vmatprep.subr.bf16.mxu0 0
        %457 = vmatpush1.bf16.msra.mxu0 0
        %458 = vmatprep.subr.bf16.mxu0 0
        %459 = vmatpush1.bf16.msra.mxu0 0
        %460 = vmatprep.subr.bf16.mxu0 0
        %461 = vmatpush1.bf16.msra.mxu0 0
        %462 = vmatprep.subr.bf16.mxu0 0
        %463 = vmatpush1.bf16.msra.mxu0 0
        %464 = vmatprep.subr.bf16.mxu0 0
        %465 = vmatpush1.bf16.msra.mxu0 0
        %466 = vmatprep.subr.bf16.mxu0 %v442
        %467 = vmatpush1.bf16.msra.mxu0 %v441
        %468 = vmatprep.subr.bf16.mxu0 0
        %469 = vmatpush2.bf16.msra.mxu0 0
        %470 = vmatprep.subr.bf16.mxu0 0
        %471 = vmatpush2.bf16.msra.mxu0 0
        %472 = vmatprep.subr.bf16.mxu0 0
        %473 = vmatpush2.bf16.msra.mxu0 0
        %474 = vmatprep.subr.bf16.mxu0 0
        %475 = vmatpush2.bf16.msra.mxu0 0
        %476 = vmatprep.subr.bf16.mxu0 0
        %477 = vmatpush2.bf16.msra.mxu0 0
        %478 = vmatprep.subr.bf16.mxu0 0
        %479 = vmatpush2.bf16.msra.mxu0 0
        %480 = vmatprep.subr.bf16.mxu0 0
        %481 = vmatpush2.bf16.msra.mxu0 0
        %482 = vmatprep.subr.bf16.mxu0 0
        %483 = vmatpush2.bf16.msra.mxu0 0
        %484 = vmatprep.mubr.bf16.mxu0 0
        %485 = vmatmul.mubr.bf16.gmra.mxu0 %v447
        %v486 = vpop.f32.mrf.mxu0
        %v487 = vadd.f32 %v418, %v486
        %v488 = vpop.f32.mrf.mxu0
        %v489 = vadd.f32 %v422, %v488
        %v490 = vpop.f32.mrf.mxu0
        %v491 = vadd.f32 %v418, %v490
        %v492 = vpop.f32.mrf.mxu0
        %v493 = vadd.f32 %v422, %v492
        %494 = vmatprep.mubr.bf16.mxu0 0
        %495 = vmatmul.mubr.bf16.gmra.mxu0 %v450
        %v496 = vpop.f32.mrf.mxu0
        %v497 = vadd.f32 %v418, %v496
        %v498 = vpop.f32.mrf.mxu0
        %v499 = vadd.f32 %v422, %v498
        %v500 = vpop.f32.mrf.mxu0
        %v501 = vadd.f32 %v418, %v500
        %v502 = vpop.f32.mrf.mxu0
        %v503 = vadd.f32 %v422, %v502
        %504 = vdwg.mxu0
        %v505 = vld [vmem:[%s2] sm:$0xff]
        %v506 = vld [vmem:[%s2 + $0x8] sm:$0xff]
        %v507 = vld [vmem:[%s2 + $0x10] sm:$0xff]
        %v508 = vld [vmem:[%s2 + $0x18] sm:$0xff]
        %v509 = vld [vmem:[%s2 + $0x20] sm:$0xff]
        %v510 = vld [vmem:[%s2 + $0x28] sm:$0xff]
        %v511 = vld [vmem:[%s2 + $0x30] sm:$0xff]
        %v512 = vld [vmem:[%s2 + $0x38] sm:$0xff]
        %v513 = vld [vmem:[#allocation11] sm:$0xff]
        %v514 = vld [vmem:[#allocation11 + $0x8] sm:$0xff]
        %v515 = vld [vmem:[#allocation11 + $0x10] sm:$0xff]
        %v516 = vld [vmem:[#allocation11 + $0x18] sm:$0xff]
        %v517 = vld [vmem:[#allocation11 + $0x20] sm:$0xff]
        %v518 = vld [vmem:[#allocation11 + $0x28] sm:$0xff]
        %v519 = vld [vmem:[#allocation11 + $0x30] sm:$0xff]
        %v520 = vld [vmem:[#allocation11 + $0x38] sm:$0xff]
        %v521 = vld [vmem:[#allocation11 + $0x40] sm:$0xff]
        %v522 = vld [vmem:[#allocation11 + $0x48] sm:$0xff]
        %v523 = vld [vmem:[#allocation11 + $0x50] sm:$0xff]
        %v524 = vld [vmem:[#allocation11 + $0x58] sm:$0xff]
        %v525 = vld [vmem:[#allocation11 + $0x60] sm:$0xff]
        %v526 = vld [vmem:[#allocation11 + $0x68] sm:$0xff]
        %v527 = vld [vmem:[#allocation11 + $0x70] sm:$0xff]
        %v528 = vld [vmem:[#allocation11 + $0x78] sm:$0xff]
        %v529 = vld [vmem:[%s5] sm:$0x3]
        %v531 = vlaneseq
        %v532 = vshrl.u32 %v531, 7
        %v533 = vsub.s32 0, %v532
        %v534 = vrot.slane %v529, %v533
        %v535 = vlaneseq
        %v536 = vshrl.u32 %v535, 7
        %v537 = vsub.s32 1, %v536
        %v538 = vrot.slane %v529, %v537
        %v541 = vld [vmem:[#allocation2] sm:$0xff]
        %v542 = vld [vmem:[#allocation3] sm:$0xff]
        %v543 = vld [vmem:[#allocation4] sm:$0xff]
        %v544 = vld [vmem:[#allocation5] sm:$0xff]
        %v545 = vpack.c.bf16 %v541, %v541
        %v554 = vunpack.c.l.b16 %v505
        %v555 = vunpack.c.h.b16 %v505
        %v556 = vunpack.c.l.b16 %v506
        %v557 = vunpack.c.h.b16 %v506
        %v558 = vunpack.c.l.b16 %v507
        %v559 = vunpack.c.h.b16 %v507
        %v560 = vunpack.c.l.b16 %v508
        %v561 = vunpack.c.h.b16 %v508
        %v562 = vunpack.c.l.b16 %v509
        %v563 = vunpack.c.h.b16 %v509
        %v564 = vunpack.c.l.b16 %v510
        %v565 = vunpack.c.h.b16 %v510
        %v566 = vunpack.c.l.b16 %v511
        %v567 = vunpack.c.h.b16 %v511
        %v568 = vunpack.c.l.b16 %v512
        %v569 = vunpack.c.h.b16 %v512
        %v570 = vpack.c.b16 %v556, %v554
        %v571 = vpack.c.b16 %v557, %v555
        %v572 = vpack.c.b16 %v560, %v558
        %v573 = vpack.c.b16 %v561, %v559
        %v574 = vpack.c.b16 %v564, %v562
        %v575 = vpack.c.b16 %v565, %v563
        %v576 = vpack.c.b16 %v568, %v566
        %v577 = vpack.c.b16 %v569, %v567
        %vm586 = vcmask 523264
        %v588 = vsel %vm586, %v545, 0
        %590 = vmatprep.subr.bf16.mxu0 0
        %591 = vmatpush1.bf16.msra.mxu0 0
        %592 = vmatprep.subr.bf16.mxu0 0
        %593 = vmatpush1.bf16.msra.mxu0 0
        %594 = vmatprep.subr.bf16.mxu0 0
        %595 = vmatpush1.bf16.msra.mxu0 0
        %596 = vmatprep.subr.bf16.mxu0 0
        %597 = vmatpush1.bf16.msra.mxu0 0
        %598 = vmatprep.subr.bf16.mxu0 %v577
        %599 = vmatpush1.bf16.msra.mxu0 %v576
        %600 = vmatprep.subr.bf16.mxu0 %v575
        %601 = vmatpush1.bf16.msra.mxu0 %v574
        %602 = vmatprep.subr.bf16.mxu0 %v573
        %603 = vmatpush1.bf16.msra.mxu0 %v572
        %604 = vmatprep.subr.bf16.mxu0 %v571
        %605 = vmatpush1.bf16.msra.mxu0 %v570
        %606 = vmatprep.subr.bf16.mxu0 0
        %607 = vmatpush2.bf16.msra.mxu0 0
        %608 = vmatprep.subr.bf16.mxu0 0
        %609 = vmatpush2.bf16.msra.mxu0 0
        %610 = vmatprep.subr.bf16.mxu0 0
        %611 = vmatpush2.bf16.msra.mxu0 0
        %612 = vmatprep.subr.bf16.mxu0 0
        %613 = vmatpush2.bf16.msra.mxu0 0
        %614 = vmatprep.subr.bf16.mxu0 0
        %615 = vmatpush2.bf16.msra.mxu0 0
        %616 = vmatprep.subr.bf16.mxu0 0
        %617 = vmatpush2.bf16.msra.mxu0 0
        %618 = vmatprep.subr.bf16.mxu0 0
        %619 = vmatpush2.bf16.msra.mxu0 0
        %620 = vmatprep.subr.bf16.mxu0 0
        %621 = vmatpush2.bf16.msra.mxu0 0
        %622 = vmatprep.mubr.bf16.mxu0 0
        %623 = vmatmul.mubr.bf16.gmra.mxu0 %v588
        %v624 = vpop.f32.mrf.mxu0
        %v625 = vadd.f32 0.0, %v624
        %v626 = vpop.f32.mrf.mxu0
        %v627 = vadd.f32 0.0, %v626
        %v628 = vpop.f32.mrf.mxu0
        %v629 = vpop.f32.mrf.mxu0
        %630 = vdwg.mxu0
        %v631 = vadd.f32 %v487, %v625
        %v632 = vadd.f32 %v489, %v627
        %v633 = vxor.u32 %v631, 2147483648
        %v634 = vxor.u32 %v632, 2147483648
        %v635 = vmul.f32 %v633, 1.442695
        %v636 = vpow.pop %v635
        %v637 = vmul.f32 %v634, 1.442695
        %v638 = vpow.pop %v637
        %v639 = vadd.f32 %v636, 1.0
        %v640 = vadd.f32 %v638, 1.0
        %v641 = vrcp.pop %v639
        %v642 = vmul.f32 1.0, %v641
        %v643 = vrcp.pop %v640
        %v644 = vmul.f32 1.0, %v643
        %v645 = vtanh.pop %v632
        %647 = vrot.lane.b32.xlu0 %v542, 64
        %v648 = vpop.permute.xlu0 %647
        %v650 = vmul.f32 %v642, %v648
        %652 = vrot.lane.b32.xlu0 %v645, 64
        %v653 = vpop.permute.xlu0 %652
        %v655 = vmul.f32 %v642, %v653
        %657 = vrot.lane.b32.xlu0 %v655, 64
        %v658 = vpop.permute.xlu0 %657
        %v660 = vadd.f32 %v650, %v658
        %v661 = vtanh.pop %v660
        %663 = vrot.lane.b32.xlu0 %v661, 64
        %v664 = vpop.permute.xlu0 %663
        %v666 = vmul.f32 %v644, %v664
        %668 = vrot.lane.b32.xlu0 %v543, 64
        %v669 = vpop.permute.xlu0 %668
        %v671 = vsel %vm586, %v666, %v669
        %v672 = vpack.c.bf16 %v671, %v671
        %v689 = vunpack.c.l.b16 %v513
        %v690 = vunpack.c.h.b16 %v513
        %v691 = vunpack.c.l.b16 %v514
        %v692 = vunpack.c.h.b16 %v514
        %v693 = vunpack.c.l.b16 %v515
        %v694 = vunpack.c.h.b16 %v515
        %v695 = vunpack.c.l.b16 %v516
        %v696 = vunpack.c.h.b16 %v516
        %v697 = vunpack.c.l.b16 %v517
        %v698 = vunpack.c.h.b16 %v517
        %v699 = vunpack.c.l.b16 %v518
        %v700 = vunpack.c.h.b16 %v518
        %v701 = vunpack.c.l.b16 %v519
        %v702 = vunpack.c.h.b16 %v519
        %v703 = vunpack.c.l.b16 %v520
        %v704 = vunpack.c.h.b16 %v520
        %v705 = vunpack.c.l.b16 %v521
        %v706 = vunpack.c.h.b16 %v521
        %v707 = vunpack.c.l.b16 %v522
        %v708 = vunpack.c.h.b16 %v522
        %v709 = vunpack.c.l.b16 %v523
        %v710 = vunpack.c.h.b16 %v523
        %v711 = vunpack.c.l.b16 %v524
        %v712 = vunpack.c.h.b16 %v524
        %v713 = vunpack.c.l.b16 %v525
        %v714 = vunpack.c.h.b16 %v525
        %v715 = vunpack.c.l.b16 %v526
        %v716 = vunpack.c.h.b16 %v526
        %v717 = vunpack.c.l.b16 %v527
        %v718 = vunpack.c.h.b16 %v527
        %v719 = vunpack.c.l.b16 %v528
        %v720 = vunpack.c.h.b16 %v528
        %v721 = vpack.c.b16 %v691, %v689
        %v722 = vpack.c.b16 %v692, %v690
        %v723 = vpack.c.b16 %v695, %v693
        %v724 = vpack.c.b16 %v696, %v694
        %v725 = vpack.c.b16 %v699, %v697
        %v726 = vpack.c.b16 %v700, %v698
        %v727 = vpack.c.b16 %v703, %v701
        %v728 = vpack.c.b16 %v704, %v702
        %v729 = vpack.c.b16 %v707, %v705
        %v730 = vpack.c.b16 %v708, %v706
        %v731 = vpack.c.b16 %v711, %v709
        %v732 = vpack.c.b16 %v712, %v710
        %v733 = vpack.c.b16 %v715, %v713
        %v734 = vpack.c.b16 %v716, %v714
        %v735 = vpack.c.b16 %v719, %v717
        %v736 = vpack.c.b16 %v720, %v718
        %753 = vmatprep.subr.bf16.mxu0 %v736
        %754 = vmatpush1.bf16.msra.mxu0 %v735
        %755 = vmatprep.subr.bf16.mxu0 %v734
        %756 = vmatpush1.bf16.msra.mxu0 %v733
        %757 = vmatprep.subr.bf16.mxu0 %v732
        %758 = vmatpush1.bf16.msra.mxu0 %v731
        %759 = vmatprep.subr.bf16.mxu0 %v730
        %760 = vmatpush1.bf16.msra.mxu0 %v729
        %761 = vmatprep.subr.bf16.mxu0 %v728
        %762 = vmatpush1.bf16.msra.mxu0 %v727
        %763 = vmatprep.subr.bf16.mxu0 %v726
        %764 = vmatpush1.bf16.msra.mxu0 %v725
        %765 = vmatprep.subr.bf16.mxu0 %v724
        %766 = vmatpush1.bf16.msra.mxu0 %v723
        %767 = vmatprep.subr.bf16.mxu0 %v722
        %768 = vmatpush1.bf16.msra.mxu0 %v721
        %769 = vmatprep.subr.bf16.mxu0 0
        %770 = vmatpush2.bf16.msra.mxu0 0
        %771 = vmatprep.subr.bf16.mxu0 0
        %772 = vmatpush2.bf16.msra.mxu0 0
        %773 = vmatprep.subr.bf16.mxu0 0
        %774 = vmatpush2.bf16.msra.mxu0 0
        %775 = vmatprep.subr.bf16.mxu0 0
        %776 = vmatpush2.bf16.msra.mxu0 0
        %777 = vmatprep.subr.bf16.mxu0 0
        %778 = vmatpush2.bf16.msra.mxu0 0
        %779 = vmatprep.subr.bf16.mxu0 0
        %780 = vmatpush2.bf16.msra.mxu0 0
        %781 = vmatprep.subr.bf16.mxu0 0
        %782 = vmatpush2.bf16.msra.mxu0 0
        %783 = vmatprep.subr.bf16.mxu0 0
        %784 = vmatpush2.bf16.msra.mxu0 0
        %785 = vmatprep.mubr.bf16.mxu0 0
        %786 = vmatmul.mubr.bf16.gmra.mxu0 %v672
        %v787 = vpop.f32.mrf.mxu0
        %v788 = vadd.f32 %v534, %v787
        %v789 = vpop.f32.mrf.mxu0
        %v790 = vadd.f32 %v538, %v789
        %v791 = vpop.f32.mrf.mxu0
        %v792 = vpop.f32.mrf.mxu0
        %793 = vdwg.mxu0
        %v794 = vxor.u32 %v788, 2147483648
        %v795 = vxor.u32 %v790, 2147483648
        %v796 = vmul.f32 %v794, 1.442695
        %v797 = vpow.pop %v796
        %v798 = vmul.f32 %v795, 1.442695
        %v799 = vpow.pop %v798
        %v800 = vadd.f32 %v797, 1.0
        %v801 = vadd.f32 %v799, 1.0
        %v802 = vrcp.pop %v800
        %v803 = vmul.f32 1.0, %v802
        %v804 = vrcp.pop %v801
        %v805 = vmul.f32 1.0, %v804
        %v806 = vtanh.pop %v790
        %808 = vrot.lane.b32.xlu0 %v544, 64
        %v809 = vpop.permute.xlu0 %808
        %v811 = vmul.f32 %v803, %v809
        %813 = vrot.lane.b32.xlu0 %v806, 64
        %v814 = vpop.permute.xlu0 %813
        %v816 = vmul.f32 %v803, %v814
        %818 = vrot.lane.b32.xlu0 %v816, 64
        %v819 = vpop.permute.xlu0 %818
        %v821 = vadd.f32 %v811, %v819
        %v822 = vtanh.pop %v821
        %824 = vrot.lane.b32.xlu0 %v822, 64
        %v825 = vpop.permute.xlu0 %824
        %v827 = vmul.f32 %v805, %v825
        %v828 = vpack.c.bf16 %v666, %v666
        %v830 = vsel %vm586, %v828, 0
        %832 = vmatprep.subr.bf16.mxu0 0
        %833 = vmatpush1.bf16.msra.mxu0 0
        %834 = vmatprep.subr.bf16.mxu0 0
        %835 = vmatpush1.bf16.msra.mxu0 0
        %836 = vmatprep.subr.bf16.mxu0 0
        %837 = vmatpush1.bf16.msra.mxu0 0
        %838 = vmatprep.subr.bf16.mxu0 0
        %839 = vmatpush1.bf16.msra.mxu0 0
        %840 = vmatprep.subr.bf16.mxu0 %v577
        %841 = vmatpush1.bf16.msra.mxu0 %v576
        %842 = vmatprep.subr.bf16.mxu0 %v575
        %843 = vmatpush1.bf16.msra.mxu0 %v574
        %844 = vmatprep.subr.bf16.mxu0 %v573
        %845 = vmatpush1.bf16.msra.mxu0 %v572
        %846 = vmatprep.subr.bf16.mxu0 %v571
        %847 = vmatpush1.bf16.msra.mxu0 %v570
        %848 = vmatprep.subr.bf16.mxu0 0
        %849 = vmatpush2.bf16.msra.mxu0 0
        %850 = vmatprep.subr.bf16.mxu0 0
        %851 = vmatpush2.bf16.msra.mxu0 0
        %852 = vmatprep.subr.bf16.mxu0 0
        %853 = vmatpush2.bf16.msra.mxu0 0
        %854 = vmatprep.subr.bf16.mxu0 0
        %855 = vmatpush2.bf16.msra.mxu0 0
        %856 = vmatprep.subr.bf16.mxu0 0
        %857 = vmatpush2.bf16.msra.mxu0 0
        %858 = vmatprep.subr.bf16.mxu0 0
        %859 = vmatpush2.bf16.msra.mxu0 0
        %860 = vmatprep.subr.bf16.mxu0 0
        %861 = vmatpush2.bf16.msra.mxu0 0
        %862 = vmatprep.subr.bf16.mxu0 0
        %863 = vmatpush2.bf16.msra.mxu0 0
        %864 = vmatprep.mubr.bf16.mxu0 0
        %865 = vmatmul.mubr.bf16.gmra.mxu0 %v830
        %v866 = vpop.f32.mrf.mxu0
        %v867 = vadd.f32 0.0, %v866
        %v868 = vpop.f32.mrf.mxu0
        %v869 = vadd.f32 0.0, %v868
        %v870 = vpop.f32.mrf.mxu0
        %v871 = vpop.f32.mrf.mxu0
        %872 = vdwg.mxu0
        %v873 = vadd.f32 %v491, %v867
        %v874 = vadd.f32 %v493, %v869
        %v875 = vxor.u32 %v873, 2147483648
        %v876 = vxor.u32 %v874, 2147483648
        %v877 = vmul.f32 %v875, 1.442695
        %v878 = vpow.pop %v877
        %v879 = vmul.f32 %v876, 1.442695
        %v880 = vpow.pop %v879
        %v881 = vadd.f32 %v878, 1.0
        %v882 = vadd.f32 %v880, 1.0
        %v883 = vrcp.pop %v881
        %v884 = vmul.f32 1.0, %v883
        %v885 = vrcp.pop %v882
        %v886 = vmul.f32 1.0, %v885
        %v887 = vtanh.pop %v874
        %v888 = vmul.f32 %v884, %v660
        %890 = vrot.lane.b32.xlu0 %v887, 64
        %v891 = vpop.permute.xlu0 %890
        %v893 = vmul.f32 %v884, %v891
        %895 = vrot.lane.b32.xlu0 %v893, 64
        %v896 = vpop.permute.xlu0 %895
        %v898 = vadd.f32 %v888, %v896
        %v899 = vtanh.pop %v898
        %901 = vrot.lane.b32.xlu0 %v899, 64
        %v902 = vpop.permute.xlu0 %901
        %v904 = vmul.f32 %v886, %v902
        %906 = vrot.lane.b32.xlu0 %v827, 64
        %v907 = vpop.permute.xlu0 %906
        %v909 = vsel %vm586, %v904, %v907
        %v910 = vpack.c.bf16 %v909, %v909
        %911 = vmatprep.subr.bf16.mxu0 %v736
        %912 = vmatpush1.bf16.msra.mxu0 %v735
        %913 = vmatprep.subr.bf16.mxu0 %v734
        %914 = vmatpush1.bf16.msra.mxu0 %v733
        %915 = vmatprep.subr.bf16.mxu0 %v732
        %916 = vmatpush1.bf16.msra.mxu0 %v731
        %917 = vmatprep.subr.bf16.mxu0 %v730
        %918 = vmatpush1.bf16.msra.mxu0 %v729
        %919 = vmatprep.subr.bf16.mxu0 %v728
        %920 = vmatpush1.bf16.msra.mxu0 %v727
        %921 = vmatprep.subr.bf16.mxu0 %v726
        %922 = vmatpush1.bf16.msra.mxu0 %v725
        %923 = vmatprep.subr.bf16.mxu0 %v724
        %924 = vmatpush1.bf16.msra.mxu0 %v723
        %925 = vmatprep.subr.bf16.mxu0 %v722
        %926 = vmatpush1.bf16.msra.mxu0 %v721
        %927 = vmatprep.subr.bf16.mxu0 0
        %928 = vmatpush2.bf16.msra.mxu0 0
        %929 = vmatprep.subr.bf16.mxu0 0
        %930 = vmatpush2.bf16.msra.mxu0 0
        %931 = vmatprep.subr.bf16.mxu0 0
        %932 = vmatpush2.bf16.msra.mxu0 0
        %933 = vmatprep.subr.bf16.mxu0 0
        %934 = vmatpush2.bf16.msra.mxu0 0
        %935 = vmatprep.subr.bf16.mxu0 0
        %936 = vmatpush2.bf16.msra.mxu0 0
        %937 = vmatprep.subr.bf16.mxu0 0
        %938 = vmatpush2.bf16.msra.mxu0 0
        %939 = vmatprep.subr.bf16.mxu0 0
        %940 = vmatpush2.bf16.msra.mxu0 0
        %941 = vmatprep.subr.bf16.mxu0 0
        %942 = vmatpush2.bf16.msra.mxu0 0
        %943 = vmatprep.mubr.bf16.mxu0 0
        %944 = vmatmul.mubr.bf16.gmra.mxu0 %v910
        %v945 = vpop.f32.mrf.mxu0
        %v946 = vadd.f32 %v534, %v945
        %v947 = vpop.f32.mrf.mxu0
        %v948 = vadd.f32 %v538, %v947
        %v949 = vpop.f32.mrf.mxu0
        %v950 = vpop.f32.mrf.mxu0
        %951 = vdwg.mxu0
        %v952 = vxor.u32 %v946, 2147483648
        %v953 = vxor.u32 %v948, 2147483648
        %v954 = vmul.f32 %v952, 1.442695
        %v955 = vpow.pop %v954
        %v956 = vmul.f32 %v953, 1.442695
        %v957 = vpow.pop %v956
        %v958 = vadd.f32 %v955, 1.0
        %v959 = vadd.f32 %v957, 1.0
        %v960 = vrcp.pop %v958
        %v961 = vmul.f32 1.0, %v960
        %v962 = vrcp.pop %v959
        %v963 = vmul.f32 1.0, %v962
        %v964 = vtanh.pop %v948
        %v965 = vmul.f32 %v961, %v821
        %967 = vrot.lane.b32.xlu0 %v964, 64
        %v968 = vpop.permute.xlu0 %967
        %v970 = vmul.f32 %v961, %v968
        %972 = vrot.lane.b32.xlu0 %v970, 64
        %v973 = vpop.permute.xlu0 %972
        %v975 = vadd.f32 %v965, %v973
        %v976 = vtanh.pop %v975
        %978 = vrot.lane.b32.xlu0 %v976, 64
        %v979 = vpop.permute.xlu0 %978
        %v981 = vmul.f32 %v963, %v979
        %v982 = vpack.c.bf16 %v904, %v904
        %v984 = vsel %vm586, %v982, 0
        %986 = vmatprep.subr.bf16.mxu0 0
        %987 = vmatpush1.bf16.msra.mxu0 0
        %988 = vmatprep.subr.bf16.mxu0 0
        %989 = vmatpush1.bf16.msra.mxu0 0
        %990 = vmatprep.subr.bf16.mxu0 0
        %991 = vmatpush1.bf16.msra.mxu0 0
        %992 = vmatprep.subr.bf16.mxu0 0
        %993 = vmatpush1.bf16.msra.mxu0 0
        %994 = vmatprep.subr.bf16.mxu0 %v577
        %995 = vmatpush1.bf16.msra.mxu0 %v576
        %996 = vmatprep.subr.bf16.mxu0 %v575
        %997 = vmatpush1.bf16.msra.mxu0 %v574
        %998 = vmatprep.subr.bf16.mxu0 %v573
        %999 = vmatpush1.bf16.msra.mxu0 %v572
        %1000 = vmatprep.subr.bf16.mxu0 %v571
        %1001 = vmatpush1.bf16.msra.mxu0 %v570
        %1002 = vmatprep.subr.bf16.mxu0 0
        %1003 = vmatpush2.bf16.msra.mxu0 0
        %1004 = vmatprep.subr.bf16.mxu0 0
        %1005 = vmatpush2.bf16.msra.mxu0 0
        %1006 = vmatprep.subr.bf16.mxu0 0
        %1007 = vmatpush2.bf16.msra.mxu0 0
        %1008 = vmatprep.subr.bf16.mxu0 0
        %1009 = vmatpush2.bf16.msra.mxu0 0
        %1010 = vmatprep.subr.bf16.mxu0 0
        %1011 = vmatpush2.bf16.msra.mxu0 0
        %1012 = vmatprep.subr.bf16.mxu0 0
        %1013 = vmatpush2.bf16.msra.mxu0 0
        %1014 = vmatprep.subr.bf16.mxu0 0
        %1015 = vmatpush2.bf16.msra.mxu0 0
        %1016 = vmatprep.subr.bf16.mxu0 0
        %1017 = vmatpush2.bf16.msra.mxu0 0
        %1018 = vmatprep.mubr.bf16.mxu0 0
        %1019 = vmatmul.mubr.bf16.gmra.mxu0 %v984
        %v1020 = vpop.f32.mrf.mxu0
        %v1021 = vadd.f32 0.0, %v1020
        %v1022 = vpop.f32.mrf.mxu0
        %v1023 = vadd.f32 0.0, %v1022
        %v1024 = vpop.f32.mrf.mxu0
        %v1025 = vpop.f32.mrf.mxu0
        %1026 = vdwg.mxu0
        %v1027 = vadd.f32 %v497, %v1021
        %v1028 = vadd.f32 %v499, %v1023
        %v1029 = vxor.u32 %v1027, 2147483648
        %v1030 = vxor.u32 %v1028, 2147483648
        %v1031 = vmul.f32 %v1029, 1.442695
        %v1032 = vpow.pop %v1031
        %v1033 = vmul.f32 %v1030, 1.442695
        %v1034 = vpow.pop %v1033
        %v1035 = vadd.f32 %v1032, 1.0
        %v1036 = vadd.f32 %v1034, 1.0
        %v1037 = vrcp.pop %v1035
        %v1038 = vmul.f32 1.0, %v1037
        %v1039 = vrcp.pop %v1036
        %v1040 = vmul.f32 1.0, %v1039
        %v1041 = vtanh.pop %v1028
        %v1042 = vmul.f32 %v1038, %v898
        %1044 = vrot.lane.b32.xlu0 %v1041, 64
        %v1045 = vpop.permute.xlu0 %1044
        %v1047 = vmul.f32 %v1038, %v1045
        %1049 = vrot.lane.b32.xlu0 %v1047, 64
        %v1050 = vpop.permute.xlu0 %1049
        %v1052 = vadd.f32 %v1042, %v1050
        %v1053 = vtanh.pop %v1052
        %1055 = vrot.lane.b32.xlu0 %v1053, 64
        %v1056 = vpop.permute.xlu0 %1055
        %v1058 = vmul.f32 %v1040, %v1056
        %1060 = vrot.lane.b32.xlu0 %v981, 64
        %v1061 = vpop.permute.xlu0 %1060
        %v1063 = vsel %vm586, %v1058, %v1061
        %v1064 = vpack.c.bf16 %v1063, %v1063
        %1065 = vmatprep.subr.bf16.mxu0 %v736
        %1066 = vmatpush1.bf16.msra.mxu0 %v735
        %1067 = vmatprep.subr.bf16.mxu0 %v734
        %1068 = vmatpush1.bf16.msra.mxu0 %v733
        %1069 = vmatprep.subr.bf16.mxu0 %v732
        %1070 = vmatpush1.bf16.msra.mxu0 %v731
        %1071 = vmatprep.subr.bf16.mxu0 %v730
        %1072 = vmatpush1.bf16.msra.mxu0 %v729
        %1073 = vmatprep.subr.bf16.mxu0 %v728
        %1074 = vmatpush1.bf16.msra.mxu0 %v727
        %1075 = vmatprep.subr.bf16.mxu0 %v726
        %1076 = vmatpush1.bf16.msra.mxu0 %v725
        %1077 = vmatprep.subr.bf16.mxu0 %v724
        %1078 = vmatpush1.bf16.msra.mxu0 %v723
        %1079 = vmatprep.subr.bf16.mxu0 %v722
        %1080 = vmatpush1.bf16.msra.mxu0 %v721
        %1081 = vmatprep.subr.bf16.mxu0 0
        %1082 = vmatpush2.bf16.msra.mxu0 0
        %1083 = vmatprep.subr.bf16.mxu0 0
        %1084 = vmatpush2.bf16.msra.mxu0 0
        %1085 = vmatprep.subr.bf16.mxu0 0
        %1086 = vmatpush2.bf16.msra.mxu0 0
        %1087 = vmatprep.subr.bf16.mxu0 0
        %1088 = vmatpush2.bf16.msra.mxu0 0
        %1089 = vmatprep.subr.bf16.mxu0 0
        %1090 = vmatpush2.bf16.msra.mxu0 0
        %1091 = vmatprep.subr.bf16.mxu0 0
        %1092 = vmatpush2.bf16.msra.mxu0 0
        %1093 = vmatprep.subr.bf16.mxu0 0
        %1094 = vmatpush2.bf16.msra.mxu0 0
        %1095 = vmatprep.subr.bf16.mxu0 0
        %1096 = vmatpush2.bf16.msra.mxu0 0
        %1097 = vmatprep.mubr.bf16.mxu0 0
        %1098 = vmatmul.mubr.bf16.gmra.mxu0 %v1064
        %v1099 = vpop.f32.mrf.mxu0
        %v1100 = vadd.f32 %v534, %v1099
        %v1101 = vpop.f32.mrf.mxu0
        %v1102 = vadd.f32 %v538, %v1101
        %v1103 = vpop.f32.mrf.mxu0
        %v1104 = vpop.f32.mrf.mxu0
        %1105 = vdwg.mxu0
        %v1106 = vxor.u32 %v1100, 2147483648
        %v1107 = vxor.u32 %v1102, 2147483648
        %v1108 = vmul.f32 %v1106, 1.442695
        %v1109 = vpow.pop %v1108
        %v1110 = vmul.f32 %v1107, 1.442695
        %v1111 = vpow.pop %v1110
        %v1112 = vadd.f32 %v1109, 1.0
        %v1113 = vadd.f32 %v1111, 1.0
        %v1114 = vrcp.pop %v1112
        %v1115 = vmul.f32 1.0, %v1114
        %v1116 = vrcp.pop %v1113
        %v1117 = vmul.f32 1.0, %v1116
        %v1118 = vtanh.pop %v1102
        %v1119 = vmul.f32 %v1115, %v975
        %1121 = vrot.lane.b32.xlu0 %v1118, 64
        %v1122 = vpop.permute.xlu0 %1121
        %v1124 = vmul.f32 %v1115, %v1122
        %1126 = vrot.lane.b32.xlu0 %v1124, 64
        %v1127 = vpop.permute.xlu0 %1126
        %v1129 = vadd.f32 %v1119, %v1127
        %v1130 = vtanh.pop %v1129
        %1132 = vrot.lane.b32.xlu0 %v1130, 64
        %v1133 = vpop.permute.xlu0 %1132
        %v1135 = vmul.f32 %v1117, %v1133
        %v1136 = vpack.c.bf16 %v1058, %v1058
        %v1138 = vsel %vm586, %v1136, 0
        %1140 = vmatprep.subr.bf16.mxu0 0
        %1141 = vmatpush1.bf16.msra.mxu0 0
        %1142 = vmatprep.subr.bf16.mxu0 0
        %1143 = vmatpush1.bf16.msra.mxu0 0
        %1144 = vmatprep.subr.bf16.mxu0 0
        %1145 = vmatpush1.bf16.msra.mxu0 0
        %1146 = vmatprep.subr.bf16.mxu0 0
        %1147 = vmatpush1.bf16.msra.mxu0 0
        %1148 = vmatprep.subr.bf16.mxu0 %v577
        %1149 = vmatpush1.bf16.msra.mxu0 %v576
        %1150 = vmatprep.subr.bf16.mxu0 %v575
        %1151 = vmatpush1.bf16.msra.mxu0 %v574
        %1152 = vmatprep.subr.bf16.mxu0 %v573
        %1153 = vmatpush1.bf16.msra.mxu0 %v572
        %1154 = vmatprep.subr.bf16.mxu0 %v571
        %1155 = vmatpush1.bf16.msra.mxu0 %v570
        %1156 = vmatprep.subr.bf16.mxu0 0
        %1157 = vmatpush2.bf16.msra.mxu0 0
        %1158 = vmatprep.subr.bf16.mxu0 0
        %1159 = vmatpush2.bf16.msra.mxu0 0
        %1160 = vmatprep.subr.bf16.mxu0 0
        %1161 = vmatpush2.bf16.msra.mxu0 0
        %1162 = vmatprep.subr.bf16.mxu0 0
        %1163 = vmatpush2.bf16.msra.mxu0 0
        %1164 = vmatprep.subr.bf16.mxu0 0
        %1165 = vmatpush2.bf16.msra.mxu0 0
        %1166 = vmatprep.subr.bf16.mxu0 0
        %1167 = vmatpush2.bf16.msra.mxu0 0
        %1168 = vmatprep.subr.bf16.mxu0 0
        %1169 = vmatpush2.bf16.msra.mxu0 0
        %1170 = vmatprep.subr.bf16.mxu0 0
        %1171 = vmatpush2.bf16.msra.mxu0 0
        %1172 = vmatprep.mubr.bf16.mxu0 0
        %1173 = vmatmul.mubr.bf16.gmra.mxu0 %v1138
        %v1174 = vpop.f32.mrf.mxu0
        %v1175 = vadd.f32 0.0, %v1174
        %v1176 = vpop.f32.mrf.mxu0
        %v1177 = vadd.f32 0.0, %v1176
        %v1178 = vpop.f32.mrf.mxu0
        %v1179 = vpop.f32.mrf.mxu0
        %1180 = vdwg.mxu0
        %v1181 = vadd.f32 %v501, %v1175
        %v1182 = vadd.f32 %v503, %v1177
        %v1183 = vxor.u32 %v1181, 2147483648
        %v1184 = vxor.u32 %v1182, 2147483648
        %v1185 = vmul.f32 %v1183, 1.442695
        %v1186 = vpow.pop %v1185
        %v1187 = vmul.f32 %v1184, 1.442695
        %v1188 = vpow.pop %v1187
        %v1189 = vadd.f32 %v1186, 1.0
        %v1190 = vadd.f32 %v1188, 1.0
        %v1191 = vrcp.pop %v1189
        %v1192 = vmul.f32 1.0, %v1191
        %v1193 = vrcp.pop %v1190
        %v1194 = vmul.f32 1.0, %v1193
        %v1195 = vtanh.pop %v1182
        %v1196 = vmul.f32 %v1192, %v1052
        %1198 = vrot.lane.b32.xlu0 %v1195, 64
        %v1199 = vpop.permute.xlu0 %1198
        %v1201 = vmul.f32 %v1192, %v1199
        %1203 = vrot.lane.b32.xlu0 %v1201, 64
        %v1204 = vpop.permute.xlu0 %1203
        %v1206 = vadd.f32 %v1196, %v1204
        %v1207 = vtanh.pop %v1206
        %1209 = vrot.lane.b32.xlu0 %v1207, 64
        %v1210 = vpop.permute.xlu0 %1209
        %v1212 = vmul.f32 %v1194, %v1210
        %1214 = vrot.lane.b32.xlu0 %v1135, 64
        %v1215 = vpop.permute.xlu0 %1214
        %v1217 = vsel %vm586, %v1212, %v1215
        %v1218 = vpack.c.bf16 %v1217, %v1217
        %1219 = vmatprep.subr.bf16.mxu0 %v736
        %1220 = vmatpush1.bf16.msra.mxu0 %v735
        %1221 = vmatprep.subr.bf16.mxu0 %v734
        %1222 = vmatpush1.bf16.msra.mxu0 %v733
        %1223 = vmatprep.subr.bf16.mxu0 %v732
        %1224 = vmatpush1.bf16.msra.mxu0 %v731
        %1225 = vmatprep.subr.bf16.mxu0 %v730
        %1226 = vmatpush1.bf16.msra.mxu0 %v729
        %1227 = vmatprep.subr.bf16.mxu0 %v728
        %1228 = vmatpush1.bf16.msra.mxu0 %v727
        %1229 = vmatprep.subr.bf16.mxu0 %v726
        %1230 = vmatpush1.bf16.msra.mxu0 %v725
        %1231 = vmatprep.subr.bf16.mxu0 %v724
        %1232 = vmatpush1.bf16.msra.mxu0 %v723
        %1233 = vmatprep.subr.bf16.mxu0 %v722
        %1234 = vmatpush1.bf16.msra.mxu0 %v721
        %1235 = vmatprep.subr.bf16.mxu0 0
        %1236 = vmatpush2.bf16.msra.mxu0 0
        %1237 = vmatprep.subr.bf16.mxu0 0
        %1238 = vmatpush2.bf16.msra.mxu0 0
        %1239 = vmatprep.subr.bf16.mxu0 0
        %1240 = vmatpush2.bf16.msra.mxu0 0
        %1241 = vmatprep.subr.bf16.mxu0 0
        %1242 = vmatpush2.bf16.msra.mxu0 0
        %1243 = vmatprep.subr.bf16.mxu0 0
        %1244 = vmatpush2.bf16.msra.mxu0 0
        %1245 = vmatprep.subr.bf16.mxu0 0
        %1246 = vmatpush2.bf16.msra.mxu0 0
        %1247 = vmatprep.subr.bf16.mxu0 0
        %1248 = vmatpush2.bf16.msra.mxu0 0
        %1249 = vmatprep.subr.bf16.mxu0 0
        %1250 = vmatpush2.bf16.msra.mxu0 0
        %1251 = vmatprep.mubr.bf16.mxu0 0
        %1252 = vmatmul.mubr.bf16.gmra.mxu0 %v1218
        %v1253 = vpop.f32.mrf.mxu0
        %v1254 = vadd.f32 %v534, %v1253
        %v1255 = vpop.f32.mrf.mxu0
        %v1256 = vadd.f32 %v538, %v1255
        %v1257 = vpop.f32.mrf.mxu0
        %v1258 = vpop.f32.mrf.mxu0
        %1259 = vdwg.mxu0
        %v1260 = vxor.u32 %v1254, 2147483648
        %v1261 = vxor.u32 %v1256, 2147483648
        %v1262 = vmul.f32 %v1260, 1.442695
        %v1263 = vpow.pop %v1262
        %v1264 = vmul.f32 %v1261, 1.442695
        %v1265 = vpow.pop %v1264
        %v1266 = vadd.f32 %v1263, 1.0
        %v1267 = vadd.f32 %v1265, 1.0
        %v1268 = vrcp.pop %v1266
        %v1269 = vmul.f32 1.0, %v1268
        %v1270 = vrcp.pop %v1267
        %v1271 = vmul.f32 1.0, %v1270
        %v1272 = vtanh.pop %v1256
        %v1273 = vmul.f32 %v1269, %v1129
        %1275 = vrot.lane.b32.xlu0 %v1272, 64
        %v1276 = vpop.permute.xlu0 %1275
        %v1278 = vmul.f32 %v1269, %v1276
        %1280 = vrot.lane.b32.xlu0 %v1278, 64
        %v1281 = vpop.permute.xlu0 %1280
        %v1283 = vadd.f32 %v1273, %v1281
        %v1284 = vtanh.pop %v1283
        %1286 = vrot.lane.b32.xlu0 %v1284, 64
        %v1287 = vpop.permute.xlu0 %1286
        %v1289 = vmul.f32 %v1271, %v1287
        %1290 = vst.msk [vmem:[#allocation2] sm:$0xff] %vm586, %v1212
        %1292 = vrot.lane.b32.xlu0 %v1206, 64
        %v1293 = vpop.permute.xlu0 %1292
        %1295 = vst.msk [vmem:[#allocation3] sm:$0xff] %vm586, %v1293
        %1296 = vst.msk [vmem:[#allocation4] sm:$0xff] %vm586, %v1289
        %1298 = vrot.lane.b32.xlu0 %v1283, 64
        %v1299 = vpop.permute.xlu0 %1298
        %1301 = vst.msk [vmem:[#allocation5] sm:$0xff] %vm586, %v1299
        %p1302 = scmp.eq.s32.totalorder %s27, 1
        // Predicated region
        $region77: #{tpu_custom_call.1} parent=59 // pred_check
          %p1303 = pneg %p1302
        $region78: #{tpu_custom_call.1} parent=59 // pred_check_branch
          %1305 = sbr.rel (%p1303) target = $region80
        $region79: #{tpu_custom_call.1} parent=59 // pred_region
          %v1306 = vpack.c.bf16 %v1289, %v1289
          %v1307 = vld [vmem:[%s6] sm:$0xf]
          %v1308 = vld [vmem:[%s6 + $0x4] sm:$0xf]
          %v1309 = vld [vmem:[%s6 + $0x8] sm:$0xf]
          %v1310 = vld [vmem:[%s6 + $0xc] sm:$0xf]
          %v1311 = vld [vmem:[%s6 + $0x10] sm:$0xf]
          %v1312 = vld [vmem:[%s6 + $0x14] sm:$0xf]
          %v1313 = vld [vmem:[%s6 + $0x18] sm:$0xf]
          %v1314 = vld [vmem:[%s6 + $0x1c] sm:$0xf]
          %v1315 = vld [vmem:[%s7] sm:$0x1]
          %v1317 = vlaneseq
          %v1318 = vshrl.u32 %v1317, 7
          %v1319 = vsub.s32 0, %v1318
          %v1320 = vrot.slane %v1315, %v1319
          %v1330 = vunpack.c.l.b16 %v1307
          %v1331 = vunpack.c.l.b16 %v1308
          %v1332 = vunpack.c.l.b16 %v1309
          %v1333 = vunpack.c.l.b16 %v1310
          %v1334 = vunpack.c.l.b16 %v1311
          %v1335 = vunpack.c.l.b16 %v1312
          %v1336 = vunpack.c.l.b16 %v1313
          %v1337 = vunpack.c.l.b16 %v1314
          %v1338 = vpack.c.b16 %v1331, %v1330
          %v1339 = vpack.c.b16 %v1333, %v1332
          %v1340 = vpack.c.b16 %v1335, %v1334
          %v1341 = vpack.c.b16 %v1337, %v1336
          %v1347 = vsel %vm586, %v1306, 0
          %1349 = vmatprep.subr.bf16.mxu0 0
          %1350 = vmatpush1.bf16.msra.mxu0 0
          %1351 = vmatprep.subr.bf16.mxu0 0
          %1352 = vmatpush1.bf16.msra.mxu0 0
          %1353 = vmatprep.subr.bf16.mxu0 0
          %1354 = vmatpush1.bf16.msra.mxu0 0
          %1355 = vmatprep.subr.bf16.mxu0 0
          %1356 = vmatpush1.bf16.msra.mxu0 0
          %1357 = vmatprep.subr.bf16.mxu0 0
          %1358 = vmatpush1.bf16.msra.mxu0 %v1341
          %1359 = vmatprep.subr.bf16.mxu0 0
          %1360 = vmatpush1.bf16.msra.mxu0 %v1340
          %1361 = vmatprep.subr.bf16.mxu0 0
          %1362 = vmatpush1.bf16.msra.mxu0 %v1339
          %1363 = vmatprep.subr.bf16.mxu0 0
          %1364 = vmatpush1.bf16.msra.mxu0 %v1338
          %1365 = vmatprep.subr.bf16.mxu0 0
          %1366 = vmatpush2.bf16.msra.mxu0 0
          %1367 = vmatprep.subr.bf16.mxu0 0
          %1368 = vmatpush2.bf16.msra.mxu0 0
          %1369 = vmatprep.subr.bf16.mxu0 0
          %1370 = vmatpush2.bf16.msra.mxu0 0
          %1371 = vmatprep.subr.bf16.mxu0 0
          %1372 = vmatpush2.bf16.msra.mxu0 0
          %1373 = vmatprep.subr.bf16.mxu0 0
          %1374 = vmatpush2.bf16.msra.mxu0 0
          %1375 = vmatprep.subr.bf16.mxu0 0
          %1376 = vmatpush2.bf16.msra.mxu0 0
          %1377 = vmatprep.subr.bf16.mxu0 0
          %1378 = vmatpush2.bf16.msra.mxu0 0
          %1379 = vmatprep.subr.bf16.mxu0 0
          %1380 = vmatpush2.bf16.msra.mxu0 0
          %1381 = vmatprep.mubr.bf16.mxu0 0
          %1382 = vmatmul.mubr.bf16.gmra.mxu0 %v1347
          %v1383 = vpop.f32.mrf.mxu0
          %v1384 = vadd.f32 %v1320, %v1383
          %v1385 = vpop.f32.mrf.mxu0
          %v1386 = vpop.f32.mrf.mxu0
          %v1387 = vpop.f32.mrf.mxu0
          %1388 = vdwg.mxu0
          %v1389 = vmax.f32 %v1384, 0.0
          %v1390 = vpack.c.bf16 %v1389, %v1389
          %v1391 = vld [vmem:[%s8] sm:$0xf]
          %v1392 = vld [vmem:[%s8 + $0x4] sm:$0xf]
          %v1393 = vld [vmem:[%s8 + $0x8] sm:$0xf]
          %v1394 = vld [vmem:[%s8 + $0xc] sm:$0xf]
          %v1395 = vld [vmem:[#allocation6] sm:$0x1]
          %v1397 = vlaneseq
          %v1398 = vshrl.u32 %v1397, 7
          %v1399 = vsub.s32 0, %v1398
          %v1400 = vrot.slane %v1395, %v1399
          %v1406 = vunpack.c.l.b16 %v1391
          %v1407 = vunpack.c.l.b16 %v1392
          %v1408 = vunpack.c.l.b16 %v1393
          %v1409 = vunpack.c.l.b16 %v1394
          %v1410 = vpack.c.b16 %v1407, %v1406
          %v1411 = vpack.c.b16 %v1409, %v1408
          %vm1414 = vcmask 261120
          %v1416 = vsel %vm1414, %v1390, 0
          %1418 = vmatprep.subr.bf16.mxu0 0
          %1419 = vmatpush1.bf16.msra.mxu0 0
          %1420 = vmatprep.subr.bf16.mxu0 0
          %1421 = vmatpush1.bf16.msra.mxu0 0
          %1422 = vmatprep.subr.bf16.mxu0 0
          %1423 = vmatpush1.bf16.msra.mxu0 0
          %1424 = vmatprep.subr.bf16.mxu0 0
          %1425 = vmatpush1.bf16.msra.mxu0 0
          %1426 = vmatprep.subr.bf16.mxu0 0
          %1427 = vmatpush1.bf16.msra.mxu0 0
          %1428 = vmatprep.subr.bf16.mxu0 0
          %1429 = vmatpush1.bf16.msra.mxu0 0
          %1430 = vmatprep.subr.bf16.mxu0 0
          %1431 = vmatpush1.bf16.msra.mxu0 %v1411
          %1432 = vmatprep.subr.bf16.mxu0 0
          %1433 = vmatpush1.bf16.msra.mxu0 %v1410
          %1434 = vmatprep.subr.bf16.mxu0 0
          %1435 = vmatpush2.bf16.msra.mxu0 0
          %1436 = vmatprep.subr.bf16.mxu0 0
          %1437 = vmatpush2.bf16.msra.mxu0 0
          %1438 = vmatprep.subr.bf16.mxu0 0
          %1439 = vmatpush2.bf16.msra.mxu0 0
          %1440 = vmatprep.subr.bf16.mxu0 0
          %1441 = vmatpush2.bf16.msra.mxu0 0
          %1442 = vmatprep.subr.bf16.mxu0 0
          %1443 = vmatpush2.bf16.msra.mxu0 0
          %1444 = vmatprep.subr.bf16.mxu0 0
          %1445 = vmatpush2.bf16.msra.mxu0 0
          %1446 = vmatprep.subr.bf16.mxu0 0
          %1447 = vmatpush2.bf16.msra.mxu0 0
          %1448 = vmatprep.subr.bf16.mxu0 0
          %1449 = vmatpush2.bf16.msra.mxu0 0
          %1450 = vmatprep.mubr.bf16.mxu0 0
          %1451 = vmatmul.mubr.bf16.gmra.mxu0 %v1416
          %v1452 = vpop.f32.mrf.mxu0
          %v1453 = vadd.f32 %v1400, %v1452
          %v1454 = vpop.f32.mrf.mxu0
          %v1455 = vpop.f32.mrf.mxu0
          %v1456 = vpop.f32.mrf.mxu0
          %1457 = vdwg.mxu0
          %v1458 = vxor.u32 %v1453, 2147483648
          %v1459 = vmul.f32 %v1458, 1.442695
          %v1460 = vpow.pop %v1459
          %v1461 = vadd.f32 %v1460, 1.0
          %v1462 = vrcp.pop %v1461
          %v1463 = vmul.f32 1.0, %v1462
          %vm1464 = vcmask 7168
          %1465 = vst.msk [vmem:[%s10] sm:$0xff] %vm1464, %v1463
        $region80: #{tpu_custom_call.1} parent=59 // pred_fallthru
          _
        // Predicated region
        $region81: #{tpu_custom_call.1} parent=59 // pred_check
          %p1466 = pneg %p255
        $region82: #{tpu_custom_call.1} parent=59 // pred_check_branch
          %1468 = sbr.rel (%p1466) target = $region84
        $region83: #{tpu_custom_call.1} parent=59 // pred_region
          _
        $region84: #{tpu_custom_call.1} parent=59 // pred_fallthru
          _
        // Predicated region
        $region85: #{tpu_custom_call.1} parent=59 // pred_check
          %p1469 = pneg %p255
        $region86: #{tpu_custom_call.1} parent=59 // pred_check_branch
          %1471 = sbr.rel (%p1469) target = $region88
        $region87: #{tpu_custom_call.1} parent=59 // pred_region
          _
        $region88: #{tpu_custom_call.1} parent=59 // pred_fallthru
          _
      $region60: #{tpu_custom_call.1} parent=5 // pred_fallthru
        _
      %p1472 = scmp.le.s32.totalorder 2, %s22
      // Predicated region
      $region89: #{tpu_custom_call.1} parent=5 // pred_check
        %p1473 = pneg %p1472
      $region90: #{tpu_custom_call.1} parent=5 // pred_check_branch
        %1475 = sbr.rel (%p1473) target = $region92
      $region91: #{tpu_custom_call.1} parent=5 // pred_region
        %s1476 = ssub.s32 %s22, 2
      $region92: #{tpu_custom_call.1} parent=5 // pred_fallthru
        _
    $region6: #{tpu_custom_call.1} parent=1 // loop_footer
      %s26 = sadd.s32 1, %s22
    $region7: #{tpu_custom_call.1} parent=1 // loop_footer_branch
      %21 = sbr.rel target = $region3
    $region8: #{tpu_custom_call.1} parent=1 // loop_exit
      _
    %1477 = vsyncpa [#allocation8], 1
    %s1478 = scalar_lea.sflag [#allocation8], 1
    %1479 = vsyncpa %s1478, 1
    %1480 = vsyncpa [#allocation10], 1

</llo_original>
